<compile_context>
chip_gen: v6e
topology: v6e:2x2x1
jax: 0.10.0
libtpu: 0.0.40
codegen_flags: <defaults>
</compile_context>

<pallas_src>
import jax
import jax.numpy as jnp
from jax.experimental import pallas as pl
from jax.experimental.pallas import tpu as pltpu


def _round_up(x, m):
    return ((x + m - 1) // m) * m


def _net_kernel(x_ref, w_ref, b_ref, o_ref):
    # x_ref: (tile_b, n_input) VMEM  -- contiguous rows of the untransposed x
    # w_ref: (1, n_input)      VMEM  -- weight row, resident every step
    # b_ref: (1,)              SMEM  -- scalar bias
    # o_ref: (tile_b, 1)       VMEM  -- per-row output (tiny; masked stores OK)
    x = x_ref[...]
    w = w_ref[...]

    # n_output == 1: skip the MXU.  VPU broadcast-multiply, then a cross-lane
    # (XLU) reduction over the small feature axis.
    y = jnp.sum(x * w, axis=1, keepdims=True) + b_ref[0]          # (tile_b, 1)

    # Numerically robust sigmoid with an EXACT divide: exp(-|y|) never
    # overflows, and the divide is free in this HBM-bound kernel.
    e = jnp.exp(-jnp.abs(y))
    r = 1.0 / (1.0 + e)
    o_ref[...] = jnp.where(y >= 0, r, e * r).astype(o_ref.dtype)


def _choose_tile_b(B, n_input):
    """Batch-tile sizing: big enough to amortize per-step overhead, small
    enough for v7x VMEM, and >= 2 grid steps so both v7x TCs get work."""
    lanes_padded = _round_up(n_input, 128)
    # ~2 MiB of x (HBM bytes) per grid step.
    tile = (2 * 1024 * 1024) // (4 * n_input)
    # Bound the double-buffered, lane-padded VMEM footprint of x to ~24 MiB.
    tile = min(tile, (24 * 1024 * 1024) // (2 * 4 * lanes_padded))
    # At least 512 rows so per-step overhead (~0.35 us) stays negligible.
    tile = max(tile, 512)
    # Keep >= 2 grid steps: v7x has 2 TensorCores sharing HBM bandwidth.
    tile = min(tile, _round_up((B + 1) // 2, 8))
    # Sublane alignment (second-last block dim must be a multiple of 8).
    return max(8, (tile // 8) * 8)


def net_forward(x, weight, bias):
    """sigmoid(x @ weight.T + bias) as a Pallas TPU kernel.

    x: (B, n_input) f32; weight: (n_output=1, n_input); bias: (n_output,).
    Returns (B, n_output) f32.
    """
    B, n_input = x.shape
    n_output = weight.shape[0]
    assert n_output == 1, "kernel is specialized for nn.Linear(n_input, 1)"

    x = x.astype(jnp.float32)
    w_row = weight.astype(jnp.float32)                     # (1, n_input)
    b_vec = bias.reshape(n_output).astype(jnp.float32)     # (1,)

    tile_b = _choose_tile_b(B, n_input)
    grid = (pl.cdiv(B, tile_b),)   # no jnp.pad: partial last block is masked

    out = pl.pallas_call(
        _net_kernel,
        out_shape=jax.ShapeDtypeStruct((B, n_output), jnp.float32),
        grid_spec=pltpu.PrefetchScalarGridSpec(
            num_scalar_prefetch=0,
            grid=grid,
            in_specs=[
                # x: contiguous (tile_b, n_input) rows of the ORIGINAL layout;
                # one contiguous DMA chunk per step, no strided rows.
                pl.BlockSpec((tile_b, n_input), lambda i: (i, 0)),
                # weight row: full array, resident every step.
                pl.BlockSpec((n_output, n_input), lambda i: (0, 0)),
                # scalar bias in SMEM (no padded VMEM tile, no extra stream).
                pl.BlockSpec(memory_space=pltpu.MemorySpace.SMEM),
            ],
            out_specs=pl.BlockSpec((tile_b, n_output), lambda i: (i, 0)),
        ),
        compiler_params=pltpu.CompilerParams(
            # Batch steps are independent -> shards across both TCs on v7x.
            dimension_semantics=("parallel",),
            # Tile budget is <=24 MiB double-buffered; 48 MiB is safe on
            # v7x (64 MiB physical) and generous on v5e/v6e (128 MiB).
            vmem_limit_bytes=48 * 1024 * 1024,
        ),
    )(x, w_row, b_vec)

    return out


if __name__ == "__main__":
    # Shapes consistent with the module: a single Linear(n_input, 1).
    # n_input stands in for x_train.shape[1]; B is deliberately NOT a multiple
    # of the tile so the ragged (partial last block, no jnp.pad) path is
    # exercised, while staying tiny (~128 KiB of input).
    B = 2051
    n_input = 16
    n_output = 1

    key = jax.random.PRNGKey(0)
    x = jax.random.normal(key, (B, n_input), dtype=jnp.float32)

    # Deterministic parameter init exactly as in __init__:
    #   self.l1.weight.data.fill_(1.0); self.l1.bias.data.fill_(1.0)
    weight = jnp.ones((n_output, n_input), dtype=jnp.float32)
    bias = jnp.ones((n_output,), dtype=jnp.float32)

    out = jax.block_until_ready(net_forward(x, weight, bias))

    # Cross-check against plain JAX reference (exact divide -> tight tol).
    ref = jax.nn.sigmoid(x @ weight.T + bias)
    assert out.shape == (B, n_output)
    assert jnp.allclose(out, ref, atol=1e-6, rtol=1e-6), float(
        jnp.max(jnp.abs(out - ref))
    )

    print("KERNEL_OK")
</pallas_src>

<mosaic_0001>
module attributes {stable_mosaic.version = 11 : i64} {
  func.func @_net_kernel(%arg0: i32, %arg1: memref<1032x16xf32, #tpu.memory_space<vmem>>, %arg2: memref<1x16xf32, #tpu.memory_space<vmem>>, %arg3: memref<1xf32, #tpu.memory_space<smem>>, %arg4: memref<1032x1xf32, #tpu.memory_space<vmem>>) attributes {dimension_semantics = [#tpu.dimension_semantics<parallel>], iteration_bounds = array<i64: 2>, scalar_prefetch = 0 : i64, scratch_operands = 0 : i64, tpu.core_type = #tpu.core_type<tc>, window_params = [{transform_indices = @transform_0, window_bounds = array<i64: 1032, 16>}, {pipeline_mode = #tpu.pipeline_mode<synchronous>, transform_indices = @transform_1, window_bounds = array<i64: 1, 16>}, {transform_indices = @transform_2, window_bounds = array<i64: 1>}, {transform_indices = @transform_3, window_bounds = array<i64: 1032, 1>}]} {
    %c0 = arith.constant 0 : index
    %c0_0 = arith.constant 0 : index
    %0 = vector.load %arg1[%c0, %c0_0] : memref<1032x16xf32, #tpu.memory_space<vmem>>, vector<1032x16xf32>
    %c0_1 = arith.constant 0 : index
    %c0_2 = arith.constant 0 : index
    %1 = vector.load %arg2[%c0_1, %c0_2] : memref<1x16xf32, #tpu.memory_space<vmem>>, vector<1x16xf32>
    %2 = vector.broadcast %1 : vector<1x16xf32> to vector<1032x16xf32>
    %3 = arith.mulf %0, %2 : vector<1032x16xf32>
    %cst = arith.constant dense<0.000000e+00> : vector<1032xf32>
    %4 = vector.multi_reduction <add>, %3, %cst [1] : vector<1032x16xf32> to vector<1032xf32>
    %5 = vector.shape_cast %4 : vector<1032xf32> to vector<1032x1xf32>
    %c0_3 = arith.constant 0 : index
    %6 = memref.load %arg3[%c0_3] : memref<1xf32, #tpu.memory_space<smem>>
    %7 = vector.broadcast %6 : f32 to vector<1032x1xf32>
    %8 = arith.addf %5, %7 : vector<1032x1xf32>
    %9 = math.absf %8 : vector<1032x1xf32>
    %cst_4 = arith.constant 0.000000e+00 : f32
    %10 = vector.broadcast %cst_4 : f32 to vector<1032x1xf32>
    %11 = arith.subf %10, %9 : vector<1032x1xf32>
    %12 = math.exp %11 : vector<1032x1xf32>
    %cst_5 = arith.constant 1.000000e+00 : f32
    %13 = vector.broadcast %cst_5 : f32 to vector<1032x1xf32>
    %14 = arith.addf %13, %12 : vector<1032x1xf32>
    %cst_6 = arith.constant 1.000000e+00 : f32
    %15 = vector.broadcast %cst_6 : f32 to vector<1032x1xf32>
    %16 = arith.divf %15, %14 : vector<1032x1xf32>
    %cst_7 = arith.constant 0.000000e+00 : f32
    %17 = vector.broadcast %cst_7 : f32 to vector<1032x1xf32>
    %18 = arith.cmpf oge, %8, %17 : vector<1032x1xf32>
    %19 = arith.mulf %12, %16 : vector<1032x1xf32>
    %20 = arith.select %18, %16, %19 : vector<1032x1xi1>, vector<1032x1xf32>
    %c0_8 = arith.constant 0 : index
    %c0_9 = arith.constant 0 : index
    %21 = vector.load %arg4[%c0_8, %c0_9] : memref<1032x1xf32, #tpu.memory_space<vmem>>, vector<1032x1xf32>
    tpu.vector_store %arg4[%c0_8, %c0_9], %20 {strides = array<i32>} : memref<1032x1xf32, #tpu.memory_space<vmem>>, vector<1032x1xf32>,
    return
  }
  func.func @transform_0(%arg0: i32) -> (i32, i32) {
    %c0_i32 = arith.constant 0 : i32
    %c0_i32_0 = arith.constant 0 : i32
    return %arg0, %c0_i32 : i32, i32
  }
  func.func @transform_1(%arg0: i32) -> (i32, i32) {
    %c0_i32 = arith.constant 0 : i32
    %c0_i32_0 = arith.constant 0 : i32
    %c0_i32_1 = arith.constant 0 : i32
    return %c0_i32, %c0_i32_0 : i32, i32
  }
  func.func @transform_2(%arg0: i32) -> i32 {
    %c0_i32 = arith.constant 0 : i32
    %c0_i32_0 = arith.constant 0 : i32
    return %c0_i32 : i32
  }
  func.func @transform_3(%arg0: i32) -> (i32, i32) {
    %c0_i32 = arith.constant 0 : i32
    %c0_i32_0 = arith.constant 0 : i32
    return %arg0, %c0_i32 : i32, i32
  }
}

</mosaic_0001>

<llo_original>
// kernel: tpu_custom_call.1
$region0: #{tpu_custom_call.1}
  #allocation0 [shape = 'u32[]', space=smem, size = 0x4, offset = 0x4, fixed_abs, tag = 'smem constant byte address 0x4 - core index']
  #allocation1 [shape = 'u32[144,128]{1,0:T(1,128)}', space=vmem, size = 0x12000, scoped, tag = 'internal scratch']
  #allocation2 [shape = 'f32[1]{0:T(128)S(6)}', space=smem, size = 0x200, scoped, tag = 'scoped memory for tpu_custom_call.1']
  %s0 = inlined_call_operand.vmem [shape: f32[2051,16], index: 0, kind: input, shape index: {}]
  %s1 = inlined_call_operand.vmem [shape: f32[1,16], index: 1, kind: input, shape index: {}]
  %s2 = inlined_call_operand.<no memory space> [shape: f32[1], index: 2, kind: input, shape index: {}]
  %s3 = inlined_call_operand.vmem [shape: f32[2051,1], index: 3, kind: output, shape index: {}]
  %s4 = sld [smem:[#allocation0]]
  $region93: #{tpu_custom_call.1} parent=0
    _
  %s6 = ssub.s32 1, %s4
  %s7 = scalar_select 0, %s6, %s4
  %8 = sst [smem:[#allocation2]] %s2
  $region1: #{tpu_custom_call.1} parent=0
    #allocation3 [shape = 'u8[1056768]{0}', space=vmem, size = 0x102000, scoped, tag = 'output window, operand 0']
    loop: start=0, step=1, limit=4
    $region2: #{tpu_custom_call.1} parent=1 // loop_pre_header
      _
    $region3: #{tpu_custom_call.1} parent=1 // loop_header
      %s10 = sphi 0, %s14
      %p11 = scmp.ge.s32.totalorder %s10, 4
      %s20 = sphi 0, %s22
      %s23 = sphi 0, %s20
      %s24 = sphi 0, %s23
      %s40 = sphi 0, %s24
      %s44 = sphi 0, %s44
      %s46 = sphi 0, %s44
      %s47 = sphi 0, %s46
      %s61 = sphi 0, %s47
      %s65 = sphi 0, %s65
      %s67 = sphi 0, %s65
      %s68 = sphi 0, %s67
      %s82 = sphi 0, %s68
      %s88 = sphi 0, %s90
      %s91 = sphi 0, %s88
      %s92 = sphi 0, %s91
      %s108 = sphi 0, %s92
    $region4: #{tpu_custom_call.1} parent=1 // loop_header_branch
      %13 = sbr.rel (%p11) target = $region8
    $region5: #{tpu_custom_call.1} parent=1 // loop_body
      %s15 = ssub.s32 %s10, 1
      %s16 = ssub.s32 %s10, 2
      %s17 = sadd.s32 %s10, 1
      %s18 = ssub.s32 %s10, %s17
      %p19 = scmp.eq.s32.totalorder %s18, 0
      %s21 = sadd.s32 %s20, 1
      %s22 = scalar_select %p19, %s20, %s21
      %p25 = pneg %p19
      %p26 = scmp.eq.s32.totalorder %s10, 1
      %p27 = por %p25, %p26
      %p28 = scmp.ne.s32.totalorder %s20, %s23
      %p29 = scmp.eq.s32.totalorder %s10, 0
      %p30 = por %p28, %p29
      %p31 = scmp.ne.s32.totalorder %s20, %s23
      %p32 = scmp.eq.s32.totalorder %s15, 1
      %p33 = por %p31, %p32
      %p34 = scmp.ne.s32.totalorder %s23, %s24
      %p35 = scmp.eq.s32.totalorder %s15, 0
      %p36 = por %p34, %p35
      %p37 = scmp.ne.s32.totalorder %s23, %s24
      %p38 = scmp.eq.s32.totalorder %s16, 1
      %p39 = por %p37, %p38
      %p41 = scmp.ne.s32.totalorder %s24, %s40
      %p42 = scmp.eq.s32.totalorder %s16, 0
      %p43 = por %p41, %p42
      %s45 = sadd.s32 %s44, 1
      %p48 = scmp.eq.s32.totalorder %s10, 1
      %p49 = scmp.ne.s32.totalorder %s44, %s46
      %p50 = scmp.eq.s32.totalorder %s10, 0
      %p51 = por %p49, %p50
      %p52 = scmp.ne.s32.totalorder %s44, %s46
      %p53 = scmp.eq.s32.totalorder %s15, 1
      %p54 = por %p52, %p53
      %p55 = scmp.ne.s32.totalorder %s46, %s47
      %p56 = scmp.eq.s32.totalorder %s15, 0
      %p57 = por %p55, %p56
      %p58 = scmp.ne.s32.totalorder %s46, %s47
      %p59 = scmp.eq.s32.totalorder %s16, 1
      %p60 = por %p58, %p59
      %p62 = scmp.ne.s32.totalorder %s47, %s61
      %p63 = scmp.eq.s32.totalorder %s16, 0
      %p64 = por %p62, %p63
      %s66 = sadd.s32 %s65, 1
      %p69 = scmp.eq.s32.totalorder %s10, 1
      %p70 = scmp.ne.s32.totalorder %s65, %s67
      %p71 = scmp.eq.s32.totalorder %s10, 0
      %p72 = por %p70, %p71
      %p73 = scmp.ne.s32.totalorder %s65, %s67
      %p74 = scmp.eq.s32.totalorder %s15, 1
      %p75 = por %p73, %p74
      %p76 = scmp.ne.s32.totalorder %s67, %s68
      %p77 = scmp.eq.s32.totalorder %s15, 0
      %p78 = por %p76, %p77
      %p79 = scmp.ne.s32.totalorder %s67, %s68
      %p80 = scmp.eq.s32.totalorder %s16, 1
      %p81 = por %p79, %p80
      %p83 = scmp.ne.s32.totalorder %s68, %s82
      %p84 = scmp.eq.s32.totalorder %s16, 0
      %p85 = por %p83, %p84
      %s86 = ssub.s32 %s10, %s17
      %p87 = scmp.eq.s32.totalorder %s86, 0
      %s89 = sadd.s32 %s88, 1
      %s90 = scalar_select %p87, %s88, %s89
      %p93 = pneg %p87
      %p94 = scmp.eq.s32.totalorder %s10, 1
      %p95 = por %p93, %p94
      %p96 = scmp.ne.s32.totalorder %s88, %s91
      %p97 = scmp.eq.s32.totalorder %s10, 0
      %p98 = por %p96, %p97
      %p99 = scmp.ne.s32.totalorder %s88, %s91
      %p100 = scmp.eq.s32.totalorder %s15, 1
      %p101 = por %p99, %p100
      %p102 = scmp.ne.s32.totalorder %s91, %s92
      %p103 = scmp.eq.s32.totalorder %s15, 0
      %p104 = por %p102, %p103
      %p105 = scmp.ne.s32.totalorder %s91, %s92
      %p106 = scmp.eq.s32.totalorder %s16, 1
      %p107 = por %p105, %p106
      %p109 = scmp.ne.s32.totalorder %s92, %s108
      %p110 = scmp.eq.s32.totalorder %s16, 0
      %p111 = por %p109, %p110
      %p112 = scmp.le.s32.totalorder 1, %s10
      %p113 = scmp.lt.s32.totalorder %s10, 3
      %p114 = pnand %p112, %p113
      %p115 = pneg %p114
      // Predicated region
      $region9: #{tpu_custom_call.1} parent=5 // pred_check
        _
      $region10: #{tpu_custom_call.1} parent=5 // pred_check_branch
        %117 = sbr.rel (%p114) target = $region12
      $region11: #{tpu_custom_call.1} parent=5 // pred_region
        %s118 = ssub.s32 %s10, 1
        // Predicated region
        $region13: #{tpu_custom_call.1} parent=11 // pred_check
          %p119 = pneg %p57
        $region14: #{tpu_custom_call.1} parent=11 // pred_check_branch
          %121 = sbr.rel (%p119) target = $region16
        $region15: #{tpu_custom_call.1} parent=11 // pred_region
          _
        $region16: #{tpu_custom_call.1} parent=11 // pred_fallthru
          _
        // Predicated region
        $region17: #{tpu_custom_call.1} parent=11 // pred_check
          %p122 = pneg %p78
        $region18: #{tpu_custom_call.1} parent=11 // pred_check_branch
          %124 = sbr.rel (%p122) target = $region20
        $region19: #{tpu_custom_call.1} parent=11 // pred_region
          _
        $region20: #{tpu_custom_call.1} parent=11 // pred_fallthru
          _
      $region12: #{tpu_custom_call.1} parent=5 // pred_fallthru
        _
      %p125 = scmp.lt.s32.totalorder %s10, 2
      // Predicated region
      $region21: #{tpu_custom_call.1} parent=5 // pred_check
        %p126 = pneg %p125
      $region22: #{tpu_custom_call.1} parent=5 // pred_check_branch
        %128 = sbr.rel (%p126) target = $region24
      $region23: #{tpu_custom_call.1} parent=5 // pred_region
        // Predicated region
        $region25: #{tpu_custom_call.1} parent=23 // pred_check
          %p129 = pneg %p30
        $region26: #{tpu_custom_call.1} parent=23 // pred_check_branch
          %131 = sbr.rel (%p129) target = $region28
        $region27: #{tpu_custom_call.1} parent=23 // pred_region
          %s132 = smul.u32 129, %s10
          %s133 = ssub.s32 257, %s132
          %p134 = scmp.lt.s32.totalorder %s133, 129
          %s135 = scalar_select %p134, %s133, 129
          %s136 = smul.u32 128, %s135
          %p137 = scmp.lt.s32.totalorder %s132, 256
          %s138 = scalar_select %p137, %s132, 256
          %s139 = smul.addr %s138, 8
          %s140 = scalar_lea.vmem %s0, %s139
          %s141 = smul.u32 129, %s10
          %s142 = ssub.s32 257, %s141
          %p143 = scmp.lt.s32.totalorder %s142, 129
          %s144 = scalar_select %p143, %s142, 129
          %s145 = smul.u32 128, %s144
        $region28: #{tpu_custom_call.1} parent=23 // pred_fallthru
          _
      $region24: #{tpu_custom_call.1} parent=5 // pred_fallthru
        _
      %p146 = scmp.le.s32.totalorder 1, %s10
      %p147 = scmp.lt.s32.totalorder %s10, 3
      %p148 = pnand %p146, %p147
      %p149 = pneg %p148
      // Predicated region
      $region29: #{tpu_custom_call.1} parent=5 // pred_check
        _
      $region30: #{tpu_custom_call.1} parent=5 // pred_check_branch
        %151 = sbr.rel (%p148) target = $region32
      $region31: #{tpu_custom_call.1} parent=5 // pred_region
        %s152 = ssub.s32 %s10, 1
        %s153 = smul.u32 129, %s15
        %s154 = ssub.s32 257, %s153
        %p155 = scmp.lt.s32.totalorder %s154, 129
        %s156 = scalar_select %p155, %s154, 129
        %s157 = smul.u32 128, %s156
        %p158 = scmp.lt.s32.totalorder %s153, 256
        %s159 = scalar_select %p158, %s153, 256
        %s160 = smul.addr %s159, 8
        %s161 = scalar_lea.vmem %s0, %s160
        %p162 = pneg %p36
        %p163 = pneg %p33
        %p164 = pneg %p57
        %p165 = pneg %p54
        %p166 = pneg %p78
        %p167 = pneg %p75
        %p168 = pneg %p104
        %p169 = pneg %p101
        %s170 = sand.u32 %s91, 1
        %s171 = sand.u32 %s91, 1
        %s172 = smul.addr %s171, 1032
        %s173 = scalar_lea.vmem [#allocation3], %s172
        %s174 = smul.u32 129, %s15
        %s175 = ssub.s32 257, %s174
        %p176 = scmp.lt.s32.totalorder %s175, 129
        %s177 = scalar_select %p176, %s175, 129
        %s178 = smul.u32 128, %s177
        %p179 = scmp.lt.s32.totalorder %s174, 256
        %s180 = scalar_select %p179, %s174, 256
        %s181 = smul.addr %s180, 8
        %s182 = scalar_lea.vmem %s0, %s181
        %s183 = smul.u32 129, %s15
        %s184 = ssub.s32 257, %s183
        %p185 = scmp.lt.s32.totalorder %s184, 129
        %s186 = scalar_select %p185, %s184, 129
        %s187 = smul.u32 128, %s186
        %s188 = smul.u32 129, %s15
        %s189 = ssub.s32 257, %s188
        %p190 = scmp.lt.s32.totalorder %s189, 129
        %s191 = scalar_select %p190, %s189, 129
        %s192 = smul.u32 128, %s191
        %v193 = vld [vmem:[%s182] sm:$0xff]
        %v194 = vld [vmem:[%s182 + $0x8] sm:$0xff]
        %v195 = vld [vmem:[%s182 + $0x10] sm:$0xff]
        %v196 = vld [vmem:[%s182 + $0x18] sm:$0xff]
        %v197 = vld [vmem:[%s182 + $0x20] sm:$0xff]
        %v198 = vld [vmem:[%s182 + $0x28] sm:$0xff]
        %v199 = vld [vmem:[%s182 + $0x30] sm:$0xff]
        %v200 = vld [vmem:[%s182 + $0x38] sm:$0xff]
        %v201 = vld [vmem:[%s182 + $0x40] sm:$0xff]
        %v202 = vld [vmem:[%s182 + $0x48] sm:$0xff]
        %v203 = vld [vmem:[%s182 + $0x50] sm:$0xff]
        %v204 = vld [vmem:[%s182 + $0x58] sm:$0xff]
        %v205 = vld [vmem:[%s182 + $0x60] sm:$0xff]
        %v206 = vld [vmem:[%s182 + $0x68] sm:$0xff]
        %v207 = vld [vmem:[%s182 + $0x70] sm:$0xff]
        %v208 = vld [vmem:[%s182 + $0x78] sm:$0xff]
        %v209 = vld [vmem:[%s182 + $0x80] sm:$0xff]
        %v210 = vld [vmem:[%s182 + $0x88] sm:$0xff]
        %v211 = vld [vmem:[%s182 + $0x90] sm:$0xff]
        %v212 = vld [vmem:[%s182 + $0x98] sm:$0xff]
        %v213 = vld [vmem:[%s182 + $0xa0] sm:$0xff]
        %v214 = vld [vmem:[%s182 + $0xa8] sm:$0xff]
        %v215 = vld [vmem:[%s182 + $0xb0] sm:$0xff]
        %v216 = vld [vmem:[%s182 + $0xb8] sm:$0xff]
        %v217 = vld [vmem:[%s182 + $0xc0] sm:$0xff]
        %v218 = vld [vmem:[%s182 + $0xc8] sm:$0xff]
        %v219 = vld [vmem:[%s182 + $0xd0] sm:$0xff]
        %v220 = vld [vmem:[%s182 + $0xd8] sm:$0xff]
        %v221 = vld [vmem:[%s182 + $0xe0] sm:$0xff]
        %v222 = vld [vmem:[%s182 + $0xe8] sm:$0xff]
        %v223 = vld [vmem:[%s182 + $0xf0] sm:$0xff]
        %v224 = vld [vmem:[%s182 + $0xf8] sm:$0xff]
        %v225 = vld [vmem:[%s182 + $0x100] sm:$0xff]
        %v226 = vld [vmem:[%s182 + $0x108] sm:$0xff]
        %v227 = vld [vmem:[%s182 + $0x110] sm:$0xff]
        %v228 = vld [vmem:[%s182 + $0x118] sm:$0xff]
        %v229 = vld [vmem:[%s182 + $0x120] sm:$0xff]
        %v230 = vld [vmem:[%s182 + $0x128] sm:$0xff]
        %v231 = vld [vmem:[%s182 + $0x130] sm:$0xff]
        %v232 = vld [vmem:[%s182 + $0x138] sm:$0xff]
        %v233 = vld [vmem:[%s182 + $0x140] sm:$0xff]
        %v234 = vld [vmem:[%s182 + $0x148] sm:$0xff]
        %v235 = vld [vmem:[%s182 + $0x150] sm:$0xff]
        %v236 = vld [vmem:[%s182 + $0x158] sm:$0xff]
        %v237 = vld [vmem:[%s182 + $0x160] sm:$0xff]
        %v238 = vld [vmem:[%s182 + $0x168] sm:$0xff]
        %v239 = vld [vmem:[%s182 + $0x170] sm:$0xff]
        %v240 = vld [vmem:[%s182 + $0x178] sm:$0xff]
        %v241 = vld [vmem:[%s182 + $0x180] sm:$0xff]
        %v242 = vld [vmem:[%s182 + $0x188] sm:$0xff]
        %v243 = vld [vmem:[%s182 + $0x190] sm:$0xff]
        %v244 = vld [vmem:[%s182 + $0x198] sm:$0xff]
        %v245 = vld [vmem:[%s182 + $0x1a0] sm:$0xff]
        %v246 = vld [vmem:[%s182 + $0x1a8] sm:$0xff]
        %v247 = vld [vmem:[%s182 + $0x1b0] sm:$0xff]
        %v248 = vld [vmem:[%s182 + $0x1b8] sm:$0xff]
        %v249 = vld [vmem:[%s182 + $0x1c0] sm:$0xff]
        %v250 = vld [vmem:[%s182 + $0x1c8] sm:$0xff]
        %v251 = vld [vmem:[%s182 + $0x1d0] sm:$0xff]
        %v252 = vld [vmem:[%s182 + $0x1d8] sm:$0xff]
        %v253 = vld [vmem:[%s182 + $0x1e0] sm:$0xff]
        %v254 = vld [vmem:[%s182 + $0x1e8] sm:$0xff]
        %v255 = vld [vmem:[%s182 + $0x1f0] sm:$0xff]
        %v256 = vld [vmem:[%s182 + $0x1f8] sm:$0xff]
        %v257 = vld [vmem:[%s182 + $0x200] sm:$0xff]
        %v258 = vld [vmem:[%s182 + $0x208] sm:$0xff]
        %v259 = vld [vmem:[%s182 + $0x210] sm:$0xff]
        %v260 = vld [vmem:[%s182 + $0x218] sm:$0xff]
        %v261 = vld [vmem:[%s182 + $0x220] sm:$0xff]
        %v262 = vld [vmem:[%s182 + $0x228] sm:$0xff]
        %v263 = vld [vmem:[%s182 + $0x230] sm:$0xff]
        %v264 = vld [vmem:[%s182 + $0x238] sm:$0xff]
        %v265 = vld [vmem:[%s182 + $0x240] sm:$0xff]
        %v266 = vld [vmem:[%s182 + $0x248] sm:$0xff]
        %v267 = vld [vmem:[%s182 + $0x250] sm:$0xff]
        %v268 = vld [vmem:[%s182 + $0x258] sm:$0xff]
        %v269 = vld [vmem:[%s182 + $0x260] sm:$0xff]
        %v270 = vld [vmem:[%s182 + $0x268] sm:$0xff]
        %v271 = vld [vmem:[%s182 + $0x270] sm:$0xff]
        %v272 = vld [vmem:[%s182 + $0x278] sm:$0xff]
        %v273 = vld [vmem:[%s182 + $0x280] sm:$0xff]
        %v274 = vld [vmem:[%s182 + $0x288] sm:$0xff]
        %v275 = vld [vmem:[%s182 + $0x290] sm:$0xff]
        %v276 = vld [vmem:[%s182 + $0x298] sm:$0xff]
        %v277 = vld [vmem:[%s182 + $0x2a0] sm:$0xff]
        %v278 = vld [vmem:[%s182 + $0x2a8] sm:$0xff]
        %v279 = vld [vmem:[%s182 + $0x2b0] sm:$0xff]
        %v280 = vld [vmem:[%s182 + $0x2b8] sm:$0xff]
        %v281 = vld [vmem:[%s182 + $0x2c0] sm:$0xff]
        %v282 = vld [vmem:[%s182 + $0x2c8] sm:$0xff]
        %v283 = vld [vmem:[%s182 + $0x2d0] sm:$0xff]
        %v284 = vld [vmem:[%s182 + $0x2d8] sm:$0xff]
        %v285 = vld [vmem:[%s182 + $0x2e0] sm:$0xff]
        %v286 = vld [vmem:[%s182 + $0x2e8] sm:$0xff]
        %v287 = vld [vmem:[%s182 + $0x2f0] sm:$0xff]
        %v288 = vld [vmem:[%s182 + $0x2f8] sm:$0xff]
        %v289 = vld [vmem:[%s182 + $0x300] sm:$0xff]
        %v290 = vld [vmem:[%s182 + $0x308] sm:$0xff]
        %v291 = vld [vmem:[%s182 + $0x310] sm:$0xff]
        %v292 = vld [vmem:[%s182 + $0x318] sm:$0xff]
        %v293 = vld [vmem:[%s182 + $0x320] sm:$0xff]
        %v294 = vld [vmem:[%s182 + $0x328] sm:$0xff]
        %v295 = vld [vmem:[%s182 + $0x330] sm:$0xff]
        %v296 = vld [vmem:[%s182 + $0x338] sm:$0xff]
        %v297 = vld [vmem:[%s182 + $0x340] sm:$0xff]
        %v298 = vld [vmem:[%s182 + $0x348] sm:$0xff]
        %v299 = vld [vmem:[%s182 + $0x350] sm:$0xff]
        %v300 = vld [vmem:[%s182 + $0x358] sm:$0xff]
        %v301 = vld [vmem:[%s182 + $0x360] sm:$0xff]
        %v302 = vld [vmem:[%s182 + $0x368] sm:$0xff]
        %v303 = vld [vmem:[%s182 + $0x370] sm:$0xff]
        %v304 = vld [vmem:[%s182 + $0x378] sm:$0xff]
        %v305 = vld [vmem:[%s182 + $0x380] sm:$0xff]
        %v306 = vld [vmem:[%s182 + $0x388] sm:$0xff]
        %v307 = vld [vmem:[%s182 + $0x390] sm:$0xff]
        %v308 = vld [vmem:[%s182 + $0x398] sm:$0xff]
        %v309 = vld [vmem:[%s182 + $0x3a0] sm:$0xff]
        %v310 = vld [vmem:[%s182 + $0x3a8] sm:$0xff]
        %v311 = vld [vmem:[%s182 + $0x3b0] sm:$0xff]
        %v312 = vld [vmem:[%s182 + $0x3b8] sm:$0xff]
        %v313 = vld [vmem:[%s182 + $0x3c0] sm:$0xff]
        %v314 = vld [vmem:[%s182 + $0x3c8] sm:$0xff]
        %v315 = vld [vmem:[%s182 + $0x3d0] sm:$0xff]
        %v316 = vld [vmem:[%s182 + $0x3d8] sm:$0xff]
        %v317 = vld [vmem:[%s182 + $0x3e0] sm:$0xff]
        %v318 = vld [vmem:[%s182 + $0x3e8] sm:$0xff]
        %v319 = vld [vmem:[%s182 + $0x3f0] sm:$0xff]
        %v320 = vld [vmem:[%s182 + $0x3f8] sm:$0xff]
        %v321 = vld [vmem:[%s182 + $0x400] sm:$0xff]
        %v322 = vld [vmem:[%s1] sm:$0x1]
        %v324 = vlaneseq
        %v325 = vshrl.u32 %v324, 7
        %v326 = vsub.s32 0, %v325
        %v327 = vrot.slane %v322, %v326
        %v329 = vmul.f32 %v193, %v327
        %v330 = vmul.f32 %v194, %v327
        %v331 = vmul.f32 %v195, %v327
        %v332 = vmul.f32 %v196, %v327
        %v333 = vmul.f32 %v197, %v327
        %v334 = vmul.f32 %v198, %v327
        %v335 = vmul.f32 %v199, %v327
        %v336 = vmul.f32 %v200, %v327
        %v337 = vmul.f32 %v201, %v327
        %v338 = vmul.f32 %v202, %v327
        %v339 = vmul.f32 %v203, %v327
        %v340 = vmul.f32 %v204, %v327
        %v341 = vmul.f32 %v205, %v327
        %v342 = vmul.f32 %v206, %v327
        %v343 = vmul.f32 %v207, %v327
        %v344 = vmul.f32 %v208, %v327
        %v345 = vmul.f32 %v209, %v327
        %v346 = vmul.f32 %v210, %v327
        %v347 = vmul.f32 %v211, %v327
        %v348 = vmul.f32 %v212, %v327
        %v349 = vmul.f32 %v213, %v327
        %v350 = vmul.f32 %v214, %v327
        %v351 = vmul.f32 %v215, %v327
        %v352 = vmul.f32 %v216, %v327
        %v353 = vmul.f32 %v217, %v327
        %v354 = vmul.f32 %v218, %v327
        %v355 = vmul.f32 %v219, %v327
        %v356 = vmul.f32 %v220, %v327
        %v357 = vmul.f32 %v221, %v327
        %v358 = vmul.f32 %v222, %v327
        %v359 = vmul.f32 %v223, %v327
        %v360 = vmul.f32 %v224, %v327
        %v361 = vmul.f32 %v225, %v327
        %v362 = vmul.f32 %v226, %v327
        %v363 = vmul.f32 %v227, %v327
        %v364 = vmul.f32 %v228, %v327
        %v365 = vmul.f32 %v229, %v327
        %v366 = vmul.f32 %v230, %v327
        %v367 = vmul.f32 %v231, %v327
        %v368 = vmul.f32 %v232, %v327
        %v369 = vmul.f32 %v233, %v327
        %v370 = vmul.f32 %v234, %v327
        %v371 = vmul.f32 %v235, %v327
        %v372 = vmul.f32 %v236, %v327
        %v373 = vmul.f32 %v237, %v327
        %v374 = vmul.f32 %v238, %v327
        %v375 = vmul.f32 %v239, %v327
        %v376 = vmul.f32 %v240, %v327
        %v377 = vmul.f32 %v241, %v327
        %v378 = vmul.f32 %v242, %v327
        %v379 = vmul.f32 %v243, %v327
        %v380 = vmul.f32 %v244, %v327
        %v381 = vmul.f32 %v245, %v327
        %v382 = vmul.f32 %v246, %v327
        %v383 = vmul.f32 %v247, %v327
        %v384 = vmul.f32 %v248, %v327
        %v385 = vmul.f32 %v249, %v327
        %v386 = vmul.f32 %v250, %v327
        %v387 = vmul.f32 %v251, %v327
        %v388 = vmul.f32 %v252, %v327
        %v389 = vmul.f32 %v253, %v327
        %v390 = vmul.f32 %v254, %v327
        %v391 = vmul.f32 %v255, %v327
        %v392 = vmul.f32 %v256, %v327
        %v393 = vmul.f32 %v257, %v327
        %v394 = vmul.f32 %v258, %v327
        %v395 = vmul.f32 %v259, %v327
        %v396 = vmul.f32 %v260, %v327
        %v397 = vmul.f32 %v261, %v327
        %v398 = vmul.f32 %v262, %v327
        %v399 = vmul.f32 %v263, %v327
        %v400 = vmul.f32 %v264, %v327
        %v401 = vmul.f32 %v265, %v327
        %v402 = vmul.f32 %v266, %v327
        %v403 = vmul.f32 %v267, %v327
        %v404 = vmul.f32 %v268, %v327
        %v405 = vmul.f32 %v269, %v327
        %v406 = vmul.f32 %v270, %v327
        %v407 = vmul.f32 %v271, %v327
        %v408 = vmul.f32 %v272, %v327
        %v409 = vmul.f32 %v273, %v327
        %v410 = vmul.f32 %v274, %v327
        %v411 = vmul.f32 %v275, %v327
        %v412 = vmul.f32 %v276, %v327
        %v413 = vmul.f32 %v277, %v327
        %v414 = vmul.f32 %v278, %v327
        %v415 = vmul.f32 %v279, %v327
        %v416 = vmul.f32 %v280, %v327
        %v417 = vmul.f32 %v281, %v327
        %v418 = vmul.f32 %v282, %v327
        %v419 = vmul.f32 %v283, %v327
        %v420 = vmul.f32 %v284, %v327
        %v421 = vmul.f32 %v285, %v327
        %v422 = vmul.f32 %v286, %v327
        %v423 = vmul.f32 %v287, %v327
        %v424 = vmul.f32 %v288, %v327
        %v425 = vmul.f32 %v289, %v327
        %v426 = vmul.f32 %v290, %v327
        %v427 = vmul.f32 %v291, %v327
        %v428 = vmul.f32 %v292, %v327
        %v429 = vmul.f32 %v293, %v327
        %v430 = vmul.f32 %v294, %v327
        %v431 = vmul.f32 %v295, %v327
        %v432 = vmul.f32 %v296, %v327
        %v433 = vmul.f32 %v297, %v327
        %v434 = vmul.f32 %v298, %v327
        %v435 = vmul.f32 %v299, %v327
        %v436 = vmul.f32 %v300, %v327
        %v437 = vmul.f32 %v301, %v327
        %v438 = vmul.f32 %v302, %v327
        %v439 = vmul.f32 %v303, %v327
        %v440 = vmul.f32 %v304, %v327
        %v441 = vmul.f32 %v305, %v327
        %v442 = vmul.f32 %v306, %v327
        %v443 = vmul.f32 %v307, %v327
        %v444 = vmul.f32 %v308, %v327
        %v445 = vmul.f32 %v309, %v327
        %v446 = vmul.f32 %v310, %v327
        %v447 = vmul.f32 %v311, %v327
        %v448 = vmul.f32 %v312, %v327
        %v449 = vmul.f32 %v313, %v327
        %v450 = vmul.f32 %v314, %v327
        %v451 = vmul.f32 %v315, %v327
        %v452 = vmul.f32 %v316, %v327
        %v453 = vmul.f32 %v317, %v327
        %v454 = vmul.f32 %v318, %v327
        %v455 = vmul.f32 %v319, %v327
        %v456 = vmul.f32 %v320, %v327
        %v457 = vmul.f32 %v321, %v327
        %vm458 = vcmask 130048
        %v459 = vsel %vm458, %v329, 0.0
        %460 = vadd.xlane.f32.xlu0 %v459
        %v461 = vpop.xlane.xlu0 %460
        %v462 = vsel %vm458, %v330, 0.0
        %463 = vadd.xlane.f32.xlu0 %v462
        %v464 = vpop.xlane.xlu0 %463
        %v465 = vsel %vm458, %v331, 0.0
        %466 = vadd.xlane.f32.xlu0 %v465
        %v467 = vpop.xlane.xlu0 %466
        %v468 = vsel %vm458, %v332, 0.0
        %469 = vadd.xlane.f32.xlu0 %v468
        %v470 = vpop.xlane.xlu0 %469
        %v471 = vsel %vm458, %v333, 0.0
        %472 = vadd.xlane.f32.xlu0 %v471
        %v473 = vpop.xlane.xlu0 %472
        %v474 = vsel %vm458, %v334, 0.0
        %475 = vadd.xlane.f32.xlu0 %v474
        %v476 = vpop.xlane.xlu0 %475
        %v477 = vsel %vm458, %v335, 0.0
        %478 = vadd.xlane.f32.xlu0 %v477
        %v479 = vpop.xlane.xlu0 %478
        %v480 = vsel %vm458, %v336, 0.0
        %481 = vadd.xlane.f32.xlu0 %v480
        %v482 = vpop.xlane.xlu0 %481
        %v483 = vsel %vm458, %v337, 0.0
        %484 = vadd.xlane.f32.xlu0 %v483
        %v485 = vpop.xlane.xlu0 %484
        %v486 = vsel %vm458, %v338, 0.0
        %487 = vadd.xlane.f32.xlu0 %v486
        %v488 = vpop.xlane.xlu0 %487
        %v489 = vsel %vm458, %v339, 0.0
        %490 = vadd.xlane.f32.xlu0 %v489
        %v491 = vpop.xlane.xlu0 %490
        %v492 = vsel %vm458, %v340, 0.0
        %493 = vadd.xlane.f32.xlu0 %v492
        %v494 = vpop.xlane.xlu0 %493
        %v495 = vsel %vm458, %v341, 0.0
        %496 = vadd.xlane.f32.xlu0 %v495
        %v497 = vpop.xlane.xlu0 %496
        %v498 = vsel %vm458, %v342, 0.0
        %499 = vadd.xlane.f32.xlu0 %v498
        %v500 = vpop.xlane.xlu0 %499
        %v501 = vsel %vm458, %v343, 0.0
        %502 = vadd.xlane.f32.xlu0 %v501
        %v503 = vpop.xlane.xlu0 %502
        %v504 = vsel %vm458, %v344, 0.0
        %505 = vadd.xlane.f32.xlu0 %v504
        %v506 = vpop.xlane.xlu0 %505
        %v507 = vsel %vm458, %v345, 0.0
        %508 = vadd.xlane.f32.xlu0 %v507
        %v509 = vpop.xlane.xlu0 %508
        %v510 = vsel %vm458, %v346, 0.0
        %511 = vadd.xlane.f32.xlu0 %v510
        %v512 = vpop.xlane.xlu0 %511
        %v513 = vsel %vm458, %v347, 0.0
        %514 = vadd.xlane.f32.xlu0 %v513
        %v515 = vpop.xlane.xlu0 %514
        %v516 = vsel %vm458, %v348, 0.0
        %517 = vadd.xlane.f32.xlu0 %v516
        %v518 = vpop.xlane.xlu0 %517
        %v519 = vsel %vm458, %v349, 0.0
        %520 = vadd.xlane.f32.xlu0 %v519
        %v521 = vpop.xlane.xlu0 %520
        %v522 = vsel %vm458, %v350, 0.0
        %523 = vadd.xlane.f32.xlu0 %v522
        %v524 = vpop.xlane.xlu0 %523
        %v525 = vsel %vm458, %v351, 0.0
        %526 = vadd.xlane.f32.xlu0 %v525
        %v527 = vpop.xlane.xlu0 %526
        %v528 = vsel %vm458, %v352, 0.0
        %529 = vadd.xlane.f32.xlu0 %v528
        %v530 = vpop.xlane.xlu0 %529
        %v531 = vsel %vm458, %v353, 0.0
        %532 = vadd.xlane.f32.xlu0 %v531
        %v533 = vpop.xlane.xlu0 %532
        %v534 = vsel %vm458, %v354, 0.0
        %535 = vadd.xlane.f32.xlu0 %v534
        %v536 = vpop.xlane.xlu0 %535
        %v537 = vsel %vm458, %v355, 0.0
        %538 = vadd.xlane.f32.xlu0 %v537
        %v539 = vpop.xlane.xlu0 %538
        %v540 = vsel %vm458, %v356, 0.0
        %541 = vadd.xlane.f32.xlu0 %v540
        %v542 = vpop.xlane.xlu0 %541
        %v543 = vsel %vm458, %v357, 0.0
        %544 = vadd.xlane.f32.xlu0 %v543
        %v545 = vpop.xlane.xlu0 %544
        %v546 = vsel %vm458, %v358, 0.0
        %547 = vadd.xlane.f32.xlu0 %v546
        %v548 = vpop.xlane.xlu0 %547
        %v549 = vsel %vm458, %v359, 0.0
        %550 = vadd.xlane.f32.xlu0 %v549
        %v551 = vpop.xlane.xlu0 %550
        %v552 = vsel %vm458, %v360, 0.0
        %553 = vadd.xlane.f32.xlu0 %v552
        %v554 = vpop.xlane.xlu0 %553
        %v555 = vsel %vm458, %v361, 0.0
        %556 = vadd.xlane.f32.xlu0 %v555
        %v557 = vpop.xlane.xlu0 %556
        %v558 = vsel %vm458, %v362, 0.0
        %559 = vadd.xlane.f32.xlu0 %v558
        %v560 = vpop.xlane.xlu0 %559
        %v561 = vsel %vm458, %v363, 0.0
        %562 = vadd.xlane.f32.xlu0 %v561
        %v563 = vpop.xlane.xlu0 %562
        %v564 = vsel %vm458, %v364, 0.0
        %565 = vadd.xlane.f32.xlu0 %v564
        %v566 = vpop.xlane.xlu0 %565
        %v567 = vsel %vm458, %v365, 0.0
        %568 = vadd.xlane.f32.xlu0 %v567
        %v569 = vpop.xlane.xlu0 %568
        %v570 = vsel %vm458, %v366, 0.0
        %571 = vadd.xlane.f32.xlu0 %v570
        %v572 = vpop.xlane.xlu0 %571
        %v573 = vsel %vm458, %v367, 0.0
        %574 = vadd.xlane.f32.xlu0 %v573
        %v575 = vpop.xlane.xlu0 %574
        %v576 = vsel %vm458, %v368, 0.0
        %577 = vadd.xlane.f32.xlu0 %v576
        %v578 = vpop.xlane.xlu0 %577
        %v579 = vsel %vm458, %v369, 0.0
        %580 = vadd.xlane.f32.xlu0 %v579
        %v581 = vpop.xlane.xlu0 %580
        %v582 = vsel %vm458, %v370, 0.0
        %583 = vadd.xlane.f32.xlu0 %v582
        %v584 = vpop.xlane.xlu0 %583
        %v585 = vsel %vm458, %v371, 0.0
        %586 = vadd.xlane.f32.xlu0 %v585
        %v587 = vpop.xlane.xlu0 %586
        %v588 = vsel %vm458, %v372, 0.0
        %589 = vadd.xlane.f32.xlu0 %v588
        %v590 = vpop.xlane.xlu0 %589
        %v591 = vsel %vm458, %v373, 0.0
        %592 = vadd.xlane.f32.xlu0 %v591
        %v593 = vpop.xlane.xlu0 %592
        %v594 = vsel %vm458, %v374, 0.0
        %595 = vadd.xlane.f32.xlu0 %v594
        %v596 = vpop.xlane.xlu0 %595
        %v597 = vsel %vm458, %v375, 0.0
        %598 = vadd.xlane.f32.xlu0 %v597
        %v599 = vpop.xlane.xlu0 %598
        %v600 = vsel %vm458, %v376, 0.0
        %601 = vadd.xlane.f32.xlu0 %v600
        %v602 = vpop.xlane.xlu0 %601
        %v603 = vsel %vm458, %v377, 0.0
        %604 = vadd.xlane.f32.xlu0 %v603
        %v605 = vpop.xlane.xlu0 %604
        %v606 = vsel %vm458, %v378, 0.0
        %607 = vadd.xlane.f32.xlu0 %v606
        %v608 = vpop.xlane.xlu0 %607
        %v609 = vsel %vm458, %v379, 0.0
        %610 = vadd.xlane.f32.xlu0 %v609
        %v611 = vpop.xlane.xlu0 %610
        %v612 = vsel %vm458, %v380, 0.0
        %613 = vadd.xlane.f32.xlu0 %v612
        %v614 = vpop.xlane.xlu0 %613
        %v615 = vsel %vm458, %v381, 0.0
        %616 = vadd.xlane.f32.xlu0 %v615
        %v617 = vpop.xlane.xlu0 %616
        %v618 = vsel %vm458, %v382, 0.0
        %619 = vadd.xlane.f32.xlu0 %v618
        %v620 = vpop.xlane.xlu0 %619
        %v621 = vsel %vm458, %v383, 0.0
        %622 = vadd.xlane.f32.xlu0 %v621
        %v623 = vpop.xlane.xlu0 %622
        %v624 = vsel %vm458, %v384, 0.0
        %625 = vadd.xlane.f32.xlu0 %v624
        %v626 = vpop.xlane.xlu0 %625
        %v627 = vsel %vm458, %v385, 0.0
        %628 = vadd.xlane.f32.xlu0 %v627
        %v629 = vpop.xlane.xlu0 %628
        %v630 = vsel %vm458, %v386, 0.0
        %631 = vadd.xlane.f32.xlu0 %v630
        %v632 = vpop.xlane.xlu0 %631
        %v633 = vsel %vm458, %v387, 0.0
        %634 = vadd.xlane.f32.xlu0 %v633
        %v635 = vpop.xlane.xlu0 %634
        %v636 = vsel %vm458, %v388, 0.0
        %637 = vadd.xlane.f32.xlu0 %v636
        %v638 = vpop.xlane.xlu0 %637
        %v639 = vsel %vm458, %v389, 0.0
        %640 = vadd.xlane.f32.xlu0 %v639
        %v641 = vpop.xlane.xlu0 %640
        %v642 = vsel %vm458, %v390, 0.0
        %643 = vadd.xlane.f32.xlu0 %v642
        %v644 = vpop.xlane.xlu0 %643
        %v645 = vsel %vm458, %v391, 0.0
        %646 = vadd.xlane.f32.xlu0 %v645
        %v647 = vpop.xlane.xlu0 %646
        %v648 = vsel %vm458, %v392, 0.0
        %649 = vadd.xlane.f32.xlu0 %v648
        %v650 = vpop.xlane.xlu0 %649
        %v651 = vsel %vm458, %v393, 0.0
        %652 = vadd.xlane.f32.xlu0 %v651
        %v653 = vpop.xlane.xlu0 %652
        %v654 = vsel %vm458, %v394, 0.0
        %655 = vadd.xlane.f32.xlu0 %v654
        %v656 = vpop.xlane.xlu0 %655
        %v657 = vsel %vm458, %v395, 0.0
        %658 = vadd.xlane.f32.xlu0 %v657
        %v659 = vpop.xlane.xlu0 %658
        %v660 = vsel %vm458, %v396, 0.0
        %661 = vadd.xlane.f32.xlu0 %v660
        %v662 = vpop.xlane.xlu0 %661
        %v663 = vsel %vm458, %v397, 0.0
        %664 = vadd.xlane.f32.xlu0 %v663
        %v665 = vpop.xlane.xlu0 %664
        %v666 = vsel %vm458, %v398, 0.0
        %667 = vadd.xlane.f32.xlu0 %v666
        %v668 = vpop.xlane.xlu0 %667
        %v669 = vsel %vm458, %v399, 0.0
        %670 = vadd.xlane.f32.xlu0 %v669
        %v671 = vpop.xlane.xlu0 %670
        %v672 = vsel %vm458, %v400, 0.0
        %673 = vadd.xlane.f32.xlu0 %v672
        %v674 = vpop.xlane.xlu0 %673
        %v675 = vsel %vm458, %v401, 0.0
        %676 = vadd.xlane.f32.xlu0 %v675
        %v677 = vpop.xlane.xlu0 %676
        %v678 = vsel %vm458, %v402, 0.0
        %679 = vadd.xlane.f32.xlu0 %v678
        %v680 = vpop.xlane.xlu0 %679
        %v681 = vsel %vm458, %v403, 0.0
        %682 = vadd.xlane.f32.xlu0 %v681
        %v683 = vpop.xlane.xlu0 %682
        %v684 = vsel %vm458, %v404, 0.0
        %685 = vadd.xlane.f32.xlu0 %v684
        %v686 = vpop.xlane.xlu0 %685
        %v687 = vsel %vm458, %v405, 0.0
        %688 = vadd.xlane.f32.xlu0 %v687
        %v689 = vpop.xlane.xlu0 %688
        %v690 = vsel %vm458, %v406, 0.0
        %691 = vadd.xlane.f32.xlu0 %v690
        %v692 = vpop.xlane.xlu0 %691
        %v693 = vsel %vm458, %v407, 0.0
        %694 = vadd.xlane.f32.xlu0 %v693
        %v695 = vpop.xlane.xlu0 %694
        %v696 = vsel %vm458, %v408, 0.0
        %697 = vadd.xlane.f32.xlu0 %v696
        %v698 = vpop.xlane.xlu0 %697
        %v699 = vsel %vm458, %v409, 0.0
        %700 = vadd.xlane.f32.xlu0 %v699
        %v701 = vpop.xlane.xlu0 %700
        %v702 = vsel %vm458, %v410, 0.0
        %703 = vadd.xlane.f32.xlu0 %v702
        %v704 = vpop.xlane.xlu0 %703
        %v705 = vsel %vm458, %v411, 0.0
        %706 = vadd.xlane.f32.xlu0 %v705
        %v707 = vpop.xlane.xlu0 %706
        %v708 = vsel %vm458, %v412, 0.0
        %709 = vadd.xlane.f32.xlu0 %v708
        %v710 = vpop.xlane.xlu0 %709
        %v711 = vsel %vm458, %v413, 0.0
        %712 = vadd.xlane.f32.xlu0 %v711
        %v713 = vpop.xlane.xlu0 %712
        %v714 = vsel %vm458, %v414, 0.0
        %715 = vadd.xlane.f32.xlu0 %v714
        %v716 = vpop.xlane.xlu0 %715
        %v717 = vsel %vm458, %v415, 0.0
        %718 = vadd.xlane.f32.xlu0 %v717
        %v719 = vpop.xlane.xlu0 %718
        %v720 = vsel %vm458, %v416, 0.0
        %721 = vadd.xlane.f32.xlu0 %v720
        %v722 = vpop.xlane.xlu0 %721
        %v723 = vsel %vm458, %v417, 0.0
        %724 = vadd.xlane.f32.xlu0 %v723
        %v725 = vpop.xlane.xlu0 %724
        %v726 = vsel %vm458, %v418, 0.0
        %727 = vadd.xlane.f32.xlu0 %v726
        %v728 = vpop.xlane.xlu0 %727
        %v729 = vsel %vm458, %v419, 0.0
        %730 = vadd.xlane.f32.xlu0 %v729
        %v731 = vpop.xlane.xlu0 %730
        %v732 = vsel %vm458, %v420, 0.0
        %733 = vadd.xlane.f32.xlu0 %v732
        %v734 = vpop.xlane.xlu0 %733
        %v735 = vsel %vm458, %v421, 0.0
        %736 = vadd.xlane.f32.xlu0 %v735
        %v737 = vpop.xlane.xlu0 %736
        %v738 = vsel %vm458, %v422, 0.0
        %739 = vadd.xlane.f32.xlu0 %v738
        %v740 = vpop.xlane.xlu0 %739
        %v741 = vsel %vm458, %v423, 0.0
        %742 = vadd.xlane.f32.xlu0 %v741
        %v743 = vpop.xlane.xlu0 %742
        %v744 = vsel %vm458, %v424, 0.0
        %745 = vadd.xlane.f32.xlu0 %v744
        %v746 = vpop.xlane.xlu0 %745
        %v747 = vsel %vm458, %v425, 0.0
        %748 = vadd.xlane.f32.xlu0 %v747
        %v749 = vpop.xlane.xlu0 %748
        %v750 = vsel %vm458, %v426, 0.0
        %751 = vadd.xlane.f32.xlu0 %v750
        %v752 = vpop.xlane.xlu0 %751
        %v753 = vsel %vm458, %v427, 0.0
        %754 = vadd.xlane.f32.xlu0 %v753
        %v755 = vpop.xlane.xlu0 %754
        %v756 = vsel %vm458, %v428, 0.0
        %757 = vadd.xlane.f32.xlu0 %v756
        %v758 = vpop.xlane.xlu0 %757
        %v759 = vsel %vm458, %v429, 0.0
        %760 = vadd.xlane.f32.xlu0 %v759
        %v761 = vpop.xlane.xlu0 %760
        %v762 = vsel %vm458, %v430, 0.0
        %763 = vadd.xlane.f32.xlu0 %v762
        %v764 = vpop.xlane.xlu0 %763
        %v765 = vsel %vm458, %v431, 0.0
        %766 = vadd.xlane.f32.xlu0 %v765
        %v767 = vpop.xlane.xlu0 %766
        %v768 = vsel %vm458, %v432, 0.0
        %769 = vadd.xlane.f32.xlu0 %v768
        %v770 = vpop.xlane.xlu0 %769
        %v771 = vsel %vm458, %v433, 0.0
        %772 = vadd.xlane.f32.xlu0 %v771
        %v773 = vpop.xlane.xlu0 %772
        %v774 = vsel %vm458, %v434, 0.0
        %775 = vadd.xlane.f32.xlu0 %v774
        %v776 = vpop.xlane.xlu0 %775
        %v777 = vsel %vm458, %v435, 0.0
        %778 = vadd.xlane.f32.xlu0 %v777
        %v779 = vpop.xlane.xlu0 %778
        %v780 = vsel %vm458, %v436, 0.0
        %781 = vadd.xlane.f32.xlu0 %v780
        %v782 = vpop.xlane.xlu0 %781
        %v783 = vsel %vm458, %v437, 0.0
        %784 = vadd.xlane.f32.xlu0 %v783
        %v785 = vpop.xlane.xlu0 %784
        %v786 = vsel %vm458, %v438, 0.0
        %787 = vadd.xlane.f32.xlu0 %v786
        %v788 = vpop.xlane.xlu0 %787
        %v789 = vsel %vm458, %v439, 0.0
        %790 = vadd.xlane.f32.xlu0 %v789
        %v791 = vpop.xlane.xlu0 %790
        %v792 = vsel %vm458, %v440, 0.0
        %793 = vadd.xlane.f32.xlu0 %v792
        %v794 = vpop.xlane.xlu0 %793
        %v795 = vsel %vm458, %v441, 0.0
        %796 = vadd.xlane.f32.xlu0 %v795
        %v797 = vpop.xlane.xlu0 %796
        %v798 = vsel %vm458, %v442, 0.0
        %799 = vadd.xlane.f32.xlu0 %v798
        %v800 = vpop.xlane.xlu0 %799
        %v801 = vsel %vm458, %v443, 0.0
        %802 = vadd.xlane.f32.xlu0 %v801
        %v803 = vpop.xlane.xlu0 %802
        %v804 = vsel %vm458, %v444, 0.0
        %805 = vadd.xlane.f32.xlu0 %v804
        %v806 = vpop.xlane.xlu0 %805
        %v807 = vsel %vm458, %v445, 0.0
        %808 = vadd.xlane.f32.xlu0 %v807
        %v809 = vpop.xlane.xlu0 %808
        %v810 = vsel %vm458, %v446, 0.0
        %811 = vadd.xlane.f32.xlu0 %v810
        %v812 = vpop.xlane.xlu0 %811
        %v813 = vsel %vm458, %v447, 0.0
        %814 = vadd.xlane.f32.xlu0 %v813
        %v815 = vpop.xlane.xlu0 %814
        %v816 = vsel %vm458, %v448, 0.0
        %817 = vadd.xlane.f32.xlu0 %v816
        %v818 = vpop.xlane.xlu0 %817
        %v819 = vsel %vm458, %v449, 0.0
        %820 = vadd.xlane.f32.xlu0 %v819
        %v821 = vpop.xlane.xlu0 %820
        %v822 = vsel %vm458, %v450, 0.0
        %823 = vadd.xlane.f32.xlu0 %v822
        %v824 = vpop.xlane.xlu0 %823
        %v825 = vsel %vm458, %v451, 0.0
        %826 = vadd.xlane.f32.xlu0 %v825
        %v827 = vpop.xlane.xlu0 %826
        %v828 = vsel %vm458, %v452, 0.0
        %829 = vadd.xlane.f32.xlu0 %v828
        %v830 = vpop.xlane.xlu0 %829
        %v831 = vsel %vm458, %v453, 0.0
        %832 = vadd.xlane.f32.xlu0 %v831
        %v833 = vpop.xlane.xlu0 %832
        %v834 = vsel %vm458, %v454, 0.0
        %835 = vadd.xlane.f32.xlu0 %v834
        %v836 = vpop.xlane.xlu0 %835
        %v837 = vsel %vm458, %v455, 0.0
        %838 = vadd.xlane.f32.xlu0 %v837
        %v839 = vpop.xlane.xlu0 %838
        %v840 = vsel %vm458, %v456, 0.0
        %841 = vadd.xlane.f32.xlu0 %v840
        %v842 = vpop.xlane.xlu0 %841
        %v843 = vsel %vm458, %v457, 0.0
        %844 = vadd.xlane.f32.xlu0 %v843
        %v845 = vpop.xlane.xlu0 %844
        %s846 = sld [smem:[#allocation2]]
        %v847 = vstv %s846
        %v848 = vadd.f32 %v461, %v847
        %v849 = vadd.f32 %v464, %v847
        %v850 = vadd.f32 %v467, %v847
        %v851 = vadd.f32 %v470, %v847
        %v852 = vadd.f32 %v473, %v847
        %v853 = vadd.f32 %v476, %v847
        %v854 = vadd.f32 %v479, %v847
        %v855 = vadd.f32 %v482, %v847
        %v856 = vadd.f32 %v485, %v847
        %v857 = vadd.f32 %v488, %v847
        %v858 = vadd.f32 %v491, %v847
        %v859 = vadd.f32 %v494, %v847
        %v860 = vadd.f32 %v497, %v847
        %v861 = vadd.f32 %v500, %v847
        %v862 = vadd.f32 %v503, %v847
        %v863 = vadd.f32 %v506, %v847
        %v864 = vadd.f32 %v509, %v847
        %v865 = vadd.f32 %v512, %v847
        %v866 = vadd.f32 %v515, %v847
        %v867 = vadd.f32 %v518, %v847
        %v868 = vadd.f32 %v521, %v847
        %v869 = vadd.f32 %v524, %v847
        %v870 = vadd.f32 %v527, %v847
        %v871 = vadd.f32 %v530, %v847
        %v872 = vadd.f32 %v533, %v847
        %v873 = vadd.f32 %v536, %v847
        %v874 = vadd.f32 %v539, %v847
        %v875 = vadd.f32 %v542, %v847
        %v876 = vadd.f32 %v545, %v847
        %v877 = vadd.f32 %v548, %v847
        %v878 = vadd.f32 %v551, %v847
        %v879 = vadd.f32 %v554, %v847
        %v880 = vadd.f32 %v557, %v847
        %v881 = vadd.f32 %v560, %v847
        %v882 = vadd.f32 %v563, %v847
        %v883 = vadd.f32 %v566, %v847
        %v884 = vadd.f32 %v569, %v847
        %v885 = vadd.f32 %v572, %v847
        %v886 = vadd.f32 %v575, %v847
        %v887 = vadd.f32 %v578, %v847
        %v888 = vadd.f32 %v581, %v847
        %v889 = vadd.f32 %v584, %v847
        %v890 = vadd.f32 %v587, %v847
        %v891 = vadd.f32 %v590, %v847
        %v892 = vadd.f32 %v593, %v847
        %v893 = vadd.f32 %v596, %v847
        %v894 = vadd.f32 %v599, %v847
        %v895 = vadd.f32 %v602, %v847
        %v896 = vadd.f32 %v605, %v847
        %v897 = vadd.f32 %v608, %v847
        %v898 = vadd.f32 %v611, %v847
        %v899 = vadd.f32 %v614, %v847
        %v900 = vadd.f32 %v617, %v847
        %v901 = vadd.f32 %v620, %v847
        %v902 = vadd.f32 %v623, %v847
        %v903 = vadd.f32 %v626, %v847
        %v904 = vadd.f32 %v629, %v847
        %v905 = vadd.f32 %v632, %v847
        %v906 = vadd.f32 %v635, %v847
        %v907 = vadd.f32 %v638, %v847
        %v908 = vadd.f32 %v641, %v847
        %v909 = vadd.f32 %v644, %v847
        %v910 = vadd.f32 %v647, %v847
        %v911 = vadd.f32 %v650, %v847
        %v912 = vadd.f32 %v653, %v847
        %v913 = vadd.f32 %v656, %v847
        %v914 = vadd.f32 %v659, %v847
        %v915 = vadd.f32 %v662, %v847
        %v916 = vadd.f32 %v665, %v847
        %v917 = vadd.f32 %v668, %v847
        %v918 = vadd.f32 %v671, %v847
        %v919 = vadd.f32 %v674, %v847
        %v920 = vadd.f32 %v677, %v847
        %v921 = vadd.f32 %v680, %v847
        %v922 = vadd.f32 %v683, %v847
        %v923 = vadd.f32 %v686, %v847
        %v924 = vadd.f32 %v689, %v847
        %v925 = vadd.f32 %v692, %v847
        %v926 = vadd.f32 %v695, %v847
        %v927 = vadd.f32 %v698, %v847
        %v928 = vadd.f32 %v701, %v847
        %v929 = vadd.f32 %v704, %v847
        %v930 = vadd.f32 %v707, %v847
        %v931 = vadd.f32 %v710, %v847
        %v932 = vadd.f32 %v713, %v847
        %v933 = vadd.f32 %v716, %v847
        %v934 = vadd.f32 %v719, %v847
        %v935 = vadd.f32 %v722, %v847
        %v936 = vadd.f32 %v725, %v847
        %v937 = vadd.f32 %v728, %v847
        %v938 = vadd.f32 %v731, %v847
        %v939 = vadd.f32 %v734, %v847
        %v940 = vadd.f32 %v737, %v847
        %v941 = vadd.f32 %v740, %v847
        %v942 = vadd.f32 %v743, %v847
        %v943 = vadd.f32 %v746, %v847
        %v944 = vadd.f32 %v749, %v847
        %v945 = vadd.f32 %v752, %v847
        %v946 = vadd.f32 %v755, %v847
        %v947 = vadd.f32 %v758, %v847
        %v948 = vadd.f32 %v761, %v847
        %v949 = vadd.f32 %v764, %v847
        %v950 = vadd.f32 %v767, %v847
        %v951 = vadd.f32 %v770, %v847
        %v952 = vadd.f32 %v773, %v847
        %v953 = vadd.f32 %v776, %v847
        %v954 = vadd.f32 %v779, %v847
        %v955 = vadd.f32 %v782, %v847
        %v956 = vadd.f32 %v785, %v847
        %v957 = vadd.f32 %v788, %v847
        %v958 = vadd.f32 %v791, %v847
        %v959 = vadd.f32 %v794, %v847
        %v960 = vadd.f32 %v797, %v847
        %v961 = vadd.f32 %v800, %v847
        %v962 = vadd.f32 %v803, %v847
        %v963 = vadd.f32 %v806, %v847
        %v964 = vadd.f32 %v809, %v847
        %v965 = vadd.f32 %v812, %v847
        %v966 = vadd.f32 %v815, %v847
        %v967 = vadd.f32 %v818, %v847
        %v968 = vadd.f32 %v821, %v847
        %v969 = vadd.f32 %v824, %v847
        %v970 = vadd.f32 %v827, %v847
        %v971 = vadd.f32 %v830, %v847
        %v972 = vadd.f32 %v833, %v847
        %v973 = vadd.f32 %v836, %v847
        %v974 = vadd.f32 %v839, %v847
        %v975 = vadd.f32 %v842, %v847
        %v976 = vadd.f32 %v845, %v847
        %v977 = vand.u32 2147483647, %v848
        %v978 = vand.u32 2147483647, %v849
        %v979 = vand.u32 2147483647, %v850
        %v980 = vand.u32 2147483647, %v851
        %v981 = vand.u32 2147483647, %v852
        %v982 = vand.u32 2147483647, %v853
        %v983 = vand.u32 2147483647, %v854
        %v984 = vand.u32 2147483647, %v855
        %v985 = vand.u32 2147483647, %v856
        %v986 = vand.u32 2147483647, %v857
        %v987 = vand.u32 2147483647, %v858
        %v988 = vand.u32 2147483647, %v859
        %v989 = vand.u32 2147483647, %v860
        %v990 = vand.u32 2147483647, %v861
        %v991 = vand.u32 2147483647, %v862
        %v992 = vand.u32 2147483647, %v863
        %v993 = vand.u32 2147483647, %v864
        %v994 = vand.u32 2147483647, %v865
        %v995 = vand.u32 2147483647, %v866
        %v996 = vand.u32 2147483647, %v867
        %v997 = vand.u32 2147483647, %v868
        %v998 = vand.u32 2147483647, %v869
        %v999 = vand.u32 2147483647, %v870
        %v1000 = vand.u32 2147483647, %v871
        %v1001 = vand.u32 2147483647, %v872
        %v1002 = vand.u32 2147483647, %v873
        %v1003 = vand.u32 2147483647, %v874
        %v1004 = vand.u32 2147483647, %v875
        %v1005 = vand.u32 2147483647, %v876
        %v1006 = vand.u32 2147483647, %v877
        %v1007 = vand.u32 2147483647, %v878
        %v1008 = vand.u32 2147483647, %v879
        %v1009 = vand.u32 2147483647, %v880
        %v1010 = vand.u32 2147483647, %v881
        %v1011 = vand.u32 2147483647, %v882
        %v1012 = vand.u32 2147483647, %v883
        %v1013 = vand.u32 2147483647, %v884
        %v1014 = vand.u32 2147483647, %v885
        %v1015 = vand.u32 2147483647, %v886
        %v1016 = vand.u32 2147483647, %v887
        %v1017 = vand.u32 2147483647, %v888
        %v1018 = vand.u32 2147483647, %v889
        %v1019 = vand.u32 2147483647, %v890
        %v1020 = vand.u32 2147483647, %v891
        %v1021 = vand.u32 2147483647, %v892
        %v1022 = vand.u32 2147483647, %v893
        %v1023 = vand.u32 2147483647, %v894
        %v1024 = vand.u32 2147483647, %v895
        %v1025 = vand.u32 2147483647, %v896
        %v1026 = vand.u32 2147483647, %v897
        %v1027 = vand.u32 2147483647, %v898
        %v1028 = vand.u32 2147483647, %v899
        %v1029 = vand.u32 2147483647, %v900
        %v1030 = vand.u32 2147483647, %v901
        %v1031 = vand.u32 2147483647, %v902
        %v1032 = vand.u32 2147483647, %v903
        %v1033 = vand.u32 2147483647, %v904
        %v1034 = vand.u32 2147483647, %v905
        %v1035 = vand.u32 2147483647, %v906
        %v1036 = vand.u32 2147483647, %v907
        %v1037 = vand.u32 2147483647, %v908
        %v1038 = vand.u32 2147483647, %v909
        %v1039 = vand.u32 2147483647, %v910
        %v1040 = vand.u32 2147483647, %v911
        %v1041 = vand.u32 2147483647, %v912
        %v1042 = vand.u32 2147483647, %v913
        %v1043 = vand.u32 2147483647, %v914
        %v1044 = vand.u32 2147483647, %v915
        %v1045 = vand.u32 2147483647, %v916
        %v1046 = vand.u32 2147483647, %v917
        %v1047 = vand.u32 2147483647, %v918
        %v1048 = vand.u32 2147483647, %v919
        %v1049 = vand.u32 2147483647, %v920
        %v1050 = vand.u32 2147483647, %v921
        %v1051 = vand.u32 2147483647, %v922
        %v1052 = vand.u32 2147483647, %v923
        %v1053 = vand.u32 2147483647, %v924
        %v1054 = vand.u32 2147483647, %v925
        %v1055 = vand.u32 2147483647, %v926
        %v1056 = vand.u32 2147483647, %v927
        %v1057 = vand.u32 2147483647, %v928
        %v1058 = vand.u32 2147483647, %v929
        %v1059 = vand.u32 2147483647, %v930
        %v1060 = vand.u32 2147483647, %v931
        %v1061 = vand.u32 2147483647, %v932
        %v1062 = vand.u32 2147483647, %v933
        %v1063 = vand.u32 2147483647, %v934
        %v1064 = vand.u32 2147483647, %v935
        %v1065 = vand.u32 2147483647, %v936
        %v1066 = vand.u32 2147483647, %v937
        %v1067 = vand.u32 2147483647, %v938
        %v1068 = vand.u32 2147483647, %v939
        %v1069 = vand.u32 2147483647, %v940
        %v1070 = vand.u32 2147483647, %v941
        %v1071 = vand.u32 2147483647, %v942
        %v1072 = vand.u32 2147483647, %v943
        %v1073 = vand.u32 2147483647, %v944
        %v1074 = vand.u32 2147483647, %v945
        %v1075 = vand.u32 2147483647, %v946
        %v1076 = vand.u32 2147483647, %v947
        %v1077 = vand.u32 2147483647, %v948
        %v1078 = vand.u32 2147483647, %v949
        %v1079 = vand.u32 2147483647, %v950
        %v1080 = vand.u32 2147483647, %v951
        %v1081 = vand.u32 2147483647, %v952
        %v1082 = vand.u32 2147483647, %v953
        %v1083 = vand.u32 2147483647, %v954
        %v1084 = vand.u32 2147483647, %v955
        %v1085 = vand.u32 2147483647, %v956
        %v1086 = vand.u32 2147483647, %v957
        %v1087 = vand.u32 2147483647, %v958
        %v1088 = vand.u32 2147483647, %v959
        %v1089 = vand.u32 2147483647, %v960
        %v1090 = vand.u32 2147483647, %v961
        %v1091 = vand.u32 2147483647, %v962
        %v1092 = vand.u32 2147483647, %v963
        %v1093 = vand.u32 2147483647, %v964
        %v1094 = vand.u32 2147483647, %v965
        %v1095 = vand.u32 2147483647, %v966
        %v1096 = vand.u32 2147483647, %v967
        %v1097 = vand.u32 2147483647, %v968
        %v1098 = vand.u32 2147483647, %v969
        %v1099 = vand.u32 2147483647, %v970
        %v1100 = vand.u32 2147483647, %v971
        %v1101 = vand.u32 2147483647, %v972
        %v1102 = vand.u32 2147483647, %v973
        %v1103 = vand.u32 2147483647, %v974
        %v1104 = vand.u32 2147483647, %v975
        %v1105 = vand.u32 2147483647, %v976
        %v1106 = vsub.f32 0.0, %v977
        %v1107 = vsub.f32 0.0, %v978
        %v1108 = vsub.f32 0.0, %v979
        %v1109 = vsub.f32 0.0, %v980
        %v1110 = vsub.f32 0.0, %v981
        %v1111 = vsub.f32 0.0, %v982
        %v1112 = vsub.f32 0.0, %v983
        %v1113 = vsub.f32 0.0, %v984
        %v1114 = vsub.f32 0.0, %v985
        %v1115 = vsub.f32 0.0, %v986
        %v1116 = vsub.f32 0.0, %v987
        %v1117 = vsub.f32 0.0, %v988
        %v1118 = vsub.f32 0.0, %v989
        %v1119 = vsub.f32 0.0, %v990
        %v1120 = vsub.f32 0.0, %v991
        %v1121 = vsub.f32 0.0, %v992
        %v1122 = vsub.f32 0.0, %v993
        %v1123 = vsub.f32 0.0, %v994
        %v1124 = vsub.f32 0.0, %v995
        %v1125 = vsub.f32 0.0, %v996
        %v1126 = vsub.f32 0.0, %v997
        %v1127 = vsub.f32 0.0, %v998
        %v1128 = vsub.f32 0.0, %v999
        %v1129 = vsub.f32 0.0, %v1000
        %v1130 = vsub.f32 0.0, %v1001
        %v1131 = vsub.f32 0.0, %v1002
        %v1132 = vsub.f32 0.0, %v1003
        %v1133 = vsub.f32 0.0, %v1004
        %v1134 = vsub.f32 0.0, %v1005
        %v1135 = vsub.f32 0.0, %v1006
        %v1136 = vsub.f32 0.0, %v1007
        %v1137 = vsub.f32 0.0, %v1008
        %v1138 = vsub.f32 0.0, %v1009
        %v1139 = vsub.f32 0.0, %v1010
        %v1140 = vsub.f32 0.0, %v1011
        %v1141 = vsub.f32 0.0, %v1012
        %v1142 = vsub.f32 0.0, %v1013
        %v1143 = vsub.f32 0.0, %v1014
        %v1144 = vsub.f32 0.0, %v1015
        %v1145 = vsub.f32 0.0, %v1016
        %v1146 = vsub.f32 0.0, %v1017
        %v1147 = vsub.f32 0.0, %v1018
        %v1148 = vsub.f32 0.0, %v1019
        %v1149 = vsub.f32 0.0, %v1020
        %v1150 = vsub.f32 0.0, %v1021
        %v1151 = vsub.f32 0.0, %v1022
        %v1152 = vsub.f32 0.0, %v1023
        %v1153 = vsub.f32 0.0, %v1024
        %v1154 = vsub.f32 0.0, %v1025
        %v1155 = vsub.f32 0.0, %v1026
        %v1156 = vsub.f32 0.0, %v1027
        %v1157 = vsub.f32 0.0, %v1028
        %v1158 = vsub.f32 0.0, %v1029
        %v1159 = vsub.f32 0.0, %v1030
        %v1160 = vsub.f32 0.0, %v1031
        %v1161 = vsub.f32 0.0, %v1032
        %v1162 = vsub.f32 0.0, %v1033
        %v1163 = vsub.f32 0.0, %v1034
        %v1164 = vsub.f32 0.0, %v1035
        %v1165 = vsub.f32 0.0, %v1036
        %v1166 = vsub.f32 0.0, %v1037
        %v1167 = vsub.f32 0.0, %v1038
        %v1168 = vsub.f32 0.0, %v1039
        %v1169 = vsub.f32 0.0, %v1040
        %v1170 = vsub.f32 0.0, %v1041
        %v1171 = vsub.f32 0.0, %v1042
        %v1172 = vsub.f32 0.0, %v1043
        %v1173 = vsub.f32 0.0, %v1044
        %v1174 = vsub.f32 0.0, %v1045
        %v1175 = vsub.f32 0.0, %v1046
        %v1176 = vsub.f32 0.0, %v1047
        %v1177 = vsub.f32 0.0, %v1048
        %v1178 = vsub.f32 0.0, %v1049
        %v1179 = vsub.f32 0.0, %v1050
        %v1180 = vsub.f32 0.0, %v1051
        %v1181 = vsub.f32 0.0, %v1052
        %v1182 = vsub.f32 0.0, %v1053
        %v1183 = vsub.f32 0.0, %v1054
        %v1184 = vsub.f32 0.0, %v1055
        %v1185 = vsub.f32 0.0, %v1056
        %v1186 = vsub.f32 0.0, %v1057
        %v1187 = vsub.f32 0.0, %v1058
        %v1188 = vsub.f32 0.0, %v1059
        %v1189 = vsub.f32 0.0, %v1060
        %v1190 = vsub.f32 0.0, %v1061
        %v1191 = vsub.f32 0.0, %v1062
        %v1192 = vsub.f32 0.0, %v1063
        %v1193 = vsub.f32 0.0, %v1064
        %v1194 = vsub.f32 0.0, %v1065
        %v1195 = vsub.f32 0.0, %v1066
        %v1196 = vsub.f32 0.0, %v1067
        %v1197 = vsub.f32 0.0, %v1068
        %v1198 = vsub.f32 0.0, %v1069
        %v1199 = vsub.f32 0.0, %v1070
        %v1200 = vsub.f32 0.0, %v1071
        %v1201 = vsub.f32 0.0, %v1072
        %v1202 = vsub.f32 0.0, %v1073
        %v1203 = vsub.f32 0.0, %v1074
        %v1204 = vsub.f32 0.0, %v1075
        %v1205 = vsub.f32 0.0, %v1076
        %v1206 = vsub.f32 0.0, %v1077
        %v1207 = vsub.f32 0.0, %v1078
        %v1208 = vsub.f32 0.0, %v1079
        %v1209 = vsub.f32 0.0, %v1080
        %v1210 = vsub.f32 0.0, %v1081
        %v1211 = vsub.f32 0.0, %v1082
        %v1212 = vsub.f32 0.0, %v1083
        %v1213 = vsub.f32 0.0, %v1084
        %v1214 = vsub.f32 0.0, %v1085
        %v1215 = vsub.f32 0.0, %v1086
        %v1216 = vsub.f32 0.0, %v1087
        %v1217 = vsub.f32 0.0, %v1088
        %v1218 = vsub.f32 0.0, %v1089
        %v1219 = vsub.f32 0.0, %v1090
        %v1220 = vsub.f32 0.0, %v1091
        %v1221 = vsub.f32 0.0, %v1092
        %v1222 = vsub.f32 0.0, %v1093
        %v1223 = vsub.f32 0.0, %v1094
        %v1224 = vsub.f32 0.0, %v1095
        %v1225 = vsub.f32 0.0, %v1096
        %v1226 = vsub.f32 0.0, %v1097
        %v1227 = vsub.f32 0.0, %v1098
        %v1228 = vsub.f32 0.0, %v1099
        %v1229 = vsub.f32 0.0, %v1100
        %v1230 = vsub.f32 0.0, %v1101
        %v1231 = vsub.f32 0.0, %v1102
        %v1232 = vsub.f32 0.0, %v1103
        %v1233 = vsub.f32 0.0, %v1104
        %v1234 = vsub.f32 0.0, %v1105
        %v1235 = vmul.f32 %v1106, 1.442695
        %v1236 = vpow.pop %v1235
        %v1237 = vmul.f32 %v1107, 1.442695
        %v1238 = vpow.pop %v1237
        %v1239 = vmul.f32 %v1108, 1.442695
        %v1240 = vpow.pop %v1239
        %v1241 = vmul.f32 %v1109, 1.442695
        %v1242 = vpow.pop %v1241
        %v1243 = vmul.f32 %v1110, 1.442695
        %v1244 = vpow.pop %v1243
        %v1245 = vmul.f32 %v1111, 1.442695
        %v1246 = vpow.pop %v1245
        %v1247 = vmul.f32 %v1112, 1.442695
        %v1248 = vpow.pop %v1247
        %v1249 = vmul.f32 %v1113, 1.442695
        %v1250 = vpow.pop %v1249
        %v1251 = vmul.f32 %v1114, 1.442695
        %v1252 = vpow.pop %v1251
        %v1253 = vmul.f32 %v1115, 1.442695
        %v1254 = vpow.pop %v1253
        %v1255 = vmul.f32 %v1116, 1.442695
        %v1256 = vpow.pop %v1255
        %v1257 = vmul.f32 %v1117, 1.442695
        %v1258 = vpow.pop %v1257
        %v1259 = vmul.f32 %v1118, 1.442695
        %v1260 = vpow.pop %v1259
        %v1261 = vmul.f32 %v1119, 1.442695
        %v1262 = vpow.pop %v1261
        %v1263 = vmul.f32 %v1120, 1.442695
        %v1264 = vpow.pop %v1263
        %v1265 = vmul.f32 %v1121, 1.442695
        %v1266 = vpow.pop %v1265
        %v1267 = vmul.f32 %v1122, 1.442695
        %v1268 = vpow.pop %v1267
        %v1269 = vmul.f32 %v1123, 1.442695
        %v1270 = vpow.pop %v1269
        %v1271 = vmul.f32 %v1124, 1.442695
        %v1272 = vpow.pop %v1271
        %v1273 = vmul.f32 %v1125, 1.442695
        %v1274 = vpow.pop %v1273
        %v1275 = vmul.f32 %v1126, 1.442695
        %v1276 = vpow.pop %v1275
        %v1277 = vmul.f32 %v1127, 1.442695
        %v1278 = vpow.pop %v1277
        %v1279 = vmul.f32 %v1128, 1.442695
        %v1280 = vpow.pop %v1279
        %v1281 = vmul.f32 %v1129, 1.442695
        %v1282 = vpow.pop %v1281
        %v1283 = vmul.f32 %v1130, 1.442695
        %v1284 = vpow.pop %v1283
        %v1285 = vmul.f32 %v1131, 1.442695
        %v1286 = vpow.pop %v1285
        %v1287 = vmul.f32 %v1132, 1.442695
        %v1288 = vpow.pop %v1287
        %v1289 = vmul.f32 %v1133, 1.442695
        %v1290 = vpow.pop %v1289
        %v1291 = vmul.f32 %v1134, 1.442695
        %v1292 = vpow.pop %v1291
        %v1293 = vmul.f32 %v1135, 1.442695
        %v1294 = vpow.pop %v1293
        %v1295 = vmul.f32 %v1136, 1.442695
        %v1296 = vpow.pop %v1295
        %v1297 = vmul.f32 %v1137, 1.442695
        %v1298 = vpow.pop %v1297
        %v1299 = vmul.f32 %v1138, 1.442695
        %v1300 = vpow.pop %v1299
        %v1301 = vmul.f32 %v1139, 1.442695
        %v1302 = vpow.pop %v1301
        %v1303 = vmul.f32 %v1140, 1.442695
        %v1304 = vpow.pop %v1303
        %v1305 = vmul.f32 %v1141, 1.442695
        %v1306 = vpow.pop %v1305
        %v1307 = vmul.f32 %v1142, 1.442695
        %v1308 = vpow.pop %v1307
        %v1309 = vmul.f32 %v1143, 1.442695
        %v1310 = vpow.pop %v1309
        %v1311 = vmul.f32 %v1144, 1.442695
        %v1312 = vpow.pop %v1311
        %v1313 = vmul.f32 %v1145, 1.442695
        %v1314 = vpow.pop %v1313
        %v1315 = vmul.f32 %v1146, 1.442695
        %v1316 = vpow.pop %v1315
        %v1317 = vmul.f32 %v1147, 1.442695
        %v1318 = vpow.pop %v1317
        %v1319 = vmul.f32 %v1148, 1.442695
        %v1320 = vpow.pop %v1319
        %v1321 = vmul.f32 %v1149, 1.442695
        %v1322 = vpow.pop %v1321
        %v1323 = vmul.f32 %v1150, 1.442695
        %v1324 = vpow.pop %v1323
        %v1325 = vmul.f32 %v1151, 1.442695
        %v1326 = vpow.pop %v1325
        %v1327 = vmul.f32 %v1152, 1.442695
        %v1328 = vpow.pop %v1327
        %v1329 = vmul.f32 %v1153, 1.442695
        %v1330 = vpow.pop %v1329
        %v1331 = vmul.f32 %v1154, 1.442695
        %v1332 = vpow.pop %v1331
        %v1333 = vmul.f32 %v1155, 1.442695
        %v1334 = vpow.pop %v1333
        %v1335 = vmul.f32 %v1156, 1.442695
        %v1336 = vpow.pop %v1335
        %v1337 = vmul.f32 %v1157, 1.442695
        %v1338 = vpow.pop %v1337
        %v1339 = vmul.f32 %v1158, 1.442695
        %v1340 = vpow.pop %v1339
        %v1341 = vmul.f32 %v1159, 1.442695
        %v1342 = vpow.pop %v1341
        %v1343 = vmul.f32 %v1160, 1.442695
        %v1344 = vpow.pop %v1343
        %v1345 = vmul.f32 %v1161, 1.442695
        %v1346 = vpow.pop %v1345
        %v1347 = vmul.f32 %v1162, 1.442695
        %v1348 = vpow.pop %v1347
        %v1349 = vmul.f32 %v1163, 1.442695
        %v1350 = vpow.pop %v1349
        %v1351 = vmul.f32 %v1164, 1.442695
        %v1352 = vpow.pop %v1351
        %v1353 = vmul.f32 %v1165, 1.442695
        %v1354 = vpow.pop %v1353
        %v1355 = vmul.f32 %v1166, 1.442695
        %v1356 = vpow.pop %v1355
        %v1357 = vmul.f32 %v1167, 1.442695
        %v1358 = vpow.pop %v1357
        %v1359 = vmul.f32 %v1168, 1.442695
        %v1360 = vpow.pop %v1359
        %v1361 = vmul.f32 %v1169, 1.442695
        %v1362 = vpow.pop %v1361
        %v1363 = vmul.f32 %v1170, 1.442695
        %v1364 = vpow.pop %v1363
        %v1365 = vmul.f32 %v1171, 1.442695
        %v1366 = vpow.pop %v1365
        %v1367 = vmul.f32 %v1172, 1.442695
        %v1368 = vpow.pop %v1367
        %v1369 = vmul.f32 %v1173, 1.442695
        %v1370 = vpow.pop %v1369
        %v1371 = vmul.f32 %v1174, 1.442695
        %v1372 = vpow.pop %v1371
        %v1373 = vmul.f32 %v1175, 1.442695
        %v1374 = vpow.pop %v1373
        %v1375 = vmul.f32 %v1176, 1.442695
        %v1376 = vpow.pop %v1375
        %v1377 = vmul.f32 %v1177, 1.442695
        %v1378 = vpow.pop %v1377
        %v1379 = vmul.f32 %v1178, 1.442695
        %v1380 = vpow.pop %v1379
        %v1381 = vmul.f32 %v1179, 1.442695
        %v1382 = vpow.pop %v1381
        %v1383 = vmul.f32 %v1180, 1.442695
        %v1384 = vpow.pop %v1383
        %v1385 = vmul.f32 %v1181, 1.442695
        %v1386 = vpow.pop %v1385
        %v1387 = vmul.f32 %v1182, 1.442695
        %v1388 = vpow.pop %v1387
        %v1389 = vmul.f32 %v1183, 1.442695
        %v1390 = vpow.pop %v1389
        %v1391 = vmul.f32 %v1184, 1.442695
        %v1392 = vpow.pop %v1391
        %v1393 = vmul.f32 %v1185, 1.442695
        %v1394 = vpow.pop %v1393
        %v1395 = vmul.f32 %v1186, 1.442695
        %v1396 = vpow.pop %v1395
        %v1397 = vmul.f32 %v1187, 1.442695
        %v1398 = vpow.pop %v1397
        %v1399 = vmul.f32 %v1188, 1.442695
        %v1400 = vpow.pop %v1399
        %v1401 = vmul.f32 %v1189, 1.442695
        %v1402 = vpow.pop %v1401
        %v1403 = vmul.f32 %v1190, 1.442695
        %v1404 = vpow.pop %v1403
        %v1405 = vmul.f32 %v1191, 1.442695
        %v1406 = vpow.pop %v1405
        %v1407 = vmul.f32 %v1192, 1.442695
        %v1408 = vpow.pop %v1407
        %v1409 = vmul.f32 %v1193, 1.442695
        %v1410 = vpow.pop %v1409
        %v1411 = vmul.f32 %v1194, 1.442695
        %v1412 = vpow.pop %v1411
        %v1413 = vmul.f32 %v1195, 1.442695
        %v1414 = vpow.pop %v1413
        %v1415 = vmul.f32 %v1196, 1.442695
        %v1416 = vpow.pop %v1415
        %v1417 = vmul.f32 %v1197, 1.442695
        %v1418 = vpow.pop %v1417
        %v1419 = vmul.f32 %v1198, 1.442695
        %v1420 = vpow.pop %v1419
        %v1421 = vmul.f32 %v1199, 1.442695
        %v1422 = vpow.pop %v1421
        %v1423 = vmul.f32 %v1200, 1.442695
        %v1424 = vpow.pop %v1423
        %v1425 = vmul.f32 %v1201, 1.442695
        %v1426 = vpow.pop %v1425
        %v1427 = vmul.f32 %v1202, 1.442695
        %v1428 = vpow.pop %v1427
        %v1429 = vmul.f32 %v1203, 1.442695
        %v1430 = vpow.pop %v1429
        %v1431 = vmul.f32 %v1204, 1.442695
        %v1432 = vpow.pop %v1431
        %v1433 = vmul.f32 %v1205, 1.442695
        %v1434 = vpow.pop %v1433
        %v1435 = vmul.f32 %v1206, 1.442695
        %v1436 = vpow.pop %v1435
        %v1437 = vmul.f32 %v1207, 1.442695
        %v1438 = vpow.pop %v1437
        %v1439 = vmul.f32 %v1208, 1.442695
        %v1440 = vpow.pop %v1439
        %v1441 = vmul.f32 %v1209, 1.442695
        %v1442 = vpow.pop %v1441
        %v1443 = vmul.f32 %v1210, 1.442695
        %v1444 = vpow.pop %v1443
        %v1445 = vmul.f32 %v1211, 1.442695
        %v1446 = vpow.pop %v1445
        %v1447 = vmul.f32 %v1212, 1.442695
        %v1448 = vpow.pop %v1447
        %v1449 = vmul.f32 %v1213, 1.442695
        %v1450 = vpow.pop %v1449
        %v1451 = vmul.f32 %v1214, 1.442695
        %v1452 = vpow.pop %v1451
        %v1453 = vmul.f32 %v1215, 1.442695
        %v1454 = vpow.pop %v1453
        %v1455 = vmul.f32 %v1216, 1.442695
        %v1456 = vpow.pop %v1455
        %v1457 = vmul.f32 %v1217, 1.442695
        %v1458 = vpow.pop %v1457
        %v1459 = vmul.f32 %v1218, 1.442695
        %v1460 = vpow.pop %v1459
        %v1461 = vmul.f32 %v1219, 1.442695
        %v1462 = vpow.pop %v1461
        %v1463 = vmul.f32 %v1220, 1.442695
        %v1464 = vpow.pop %v1463
        %v1465 = vmul.f32 %v1221, 1.442695
        %v1466 = vpow.pop %v1465
        %v1467 = vmul.f32 %v1222, 1.442695
        %v1468 = vpow.pop %v1467
        %v1469 = vmul.f32 %v1223, 1.442695
        %v1470 = vpow.pop %v1469
        %v1471 = vmul.f32 %v1224, 1.442695
        %v1472 = vpow.pop %v1471
        %v1473 = vmul.f32 %v1225, 1.442695
        %v1474 = vpow.pop %v1473
        %v1475 = vmul.f32 %v1226, 1.442695
        %v1476 = vpow.pop %v1475
        %v1477 = vmul.f32 %v1227, 1.442695
        %v1478 = vpow.pop %v1477
        %v1479 = vmul.f32 %v1228, 1.442695
        %v1480 = vpow.pop %v1479
        %v1481 = vmul.f32 %v1229, 1.442695
        %v1482 = vpow.pop %v1481
        %v1483 = vmul.f32 %v1230, 1.442695
        %v1484 = vpow.pop %v1483
        %v1485 = vmul.f32 %v1231, 1.442695
        %v1486 = vpow.pop %v1485
        %v1487 = vmul.f32 %v1232, 1.442695
        %v1488 = vpow.pop %v1487
        %v1489 = vmul.f32 %v1233, 1.442695
        %v1490 = vpow.pop %v1489
        %v1491 = vmul.f32 %v1234, 1.442695
        %v1492 = vpow.pop %v1491
        %v1493 = vadd.f32 %v1236, 1.0
        %v1494 = vadd.f32 %v1238, 1.0
        %v1495 = vadd.f32 %v1240, 1.0
        %v1496 = vadd.f32 %v1242, 1.0
        %v1497 = vadd.f32 %v1244, 1.0
        %v1498 = vadd.f32 %v1246, 1.0
        %v1499 = vadd.f32 %v1248, 1.0
        %v1500 = vadd.f32 %v1250, 1.0
        %v1501 = vadd.f32 %v1252, 1.0
        %v1502 = vadd.f32 %v1254, 1.0
        %v1503 = vadd.f32 %v1256, 1.0
        %v1504 = vadd.f32 %v1258, 1.0
        %v1505 = vadd.f32 %v1260, 1.0
        %v1506 = vadd.f32 %v1262, 1.0
        %v1507 = vadd.f32 %v1264, 1.0
        %v1508 = vadd.f32 %v1266, 1.0
        %v1509 = vadd.f32 %v1268, 1.0
        %v1510 = vadd.f32 %v1270, 1.0
        %v1511 = vadd.f32 %v1272, 1.0
        %v1512 = vadd.f32 %v1274, 1.0
        %v1513 = vadd.f32 %v1276, 1.0
        %v1514 = vadd.f32 %v1278, 1.0
        %v1515 = vadd.f32 %v1280, 1.0
        %v1516 = vadd.f32 %v1282, 1.0
        %v1517 = vadd.f32 %v1284, 1.0
        %v1518 = vadd.f32 %v1286, 1.0
        %v1519 = vadd.f32 %v1288, 1.0
        %v1520 = vadd.f32 %v1290, 1.0
        %v1521 = vadd.f32 %v1292, 1.0
        %v1522 = vadd.f32 %v1294, 1.0
        %v1523 = vadd.f32 %v1296, 1.0
        %v1524 = vadd.f32 %v1298, 1.0
        %v1525 = vadd.f32 %v1300, 1.0
        %v1526 = vadd.f32 %v1302, 1.0
        %v1527 = vadd.f32 %v1304, 1.0
        %v1528 = vadd.f32 %v1306, 1.0
        %v1529 = vadd.f32 %v1308, 1.0
        %v1530 = vadd.f32 %v1310, 1.0
        %v1531 = vadd.f32 %v1312, 1.0
        %v1532 = vadd.f32 %v1314, 1.0
        %v1533 = vadd.f32 %v1316, 1.0
        %v1534 = vadd.f32 %v1318, 1.0
        %v1535 = vadd.f32 %v1320, 1.0
        %v1536 = vadd.f32 %v1322, 1.0
        %v1537 = vadd.f32 %v1324, 1.0
        %v1538 = vadd.f32 %v1326, 1.0
        %v1539 = vadd.f32 %v1328, 1.0
        %v1540 = vadd.f32 %v1330, 1.0
        %v1541 = vadd.f32 %v1332, 1.0
        %v1542 = vadd.f32 %v1334, 1.0
        %v1543 = vadd.f32 %v1336, 1.0
        %v1544 = vadd.f32 %v1338, 1.0
        %v1545 = vadd.f32 %v1340, 1.0
        %v1546 = vadd.f32 %v1342, 1.0
        %v1547 = vadd.f32 %v1344, 1.0
        %v1548 = vadd.f32 %v1346, 1.0
        %v1549 = vadd.f32 %v1348, 1.0
        %v1550 = vadd.f32 %v1350, 1.0
        %v1551 = vadd.f32 %v1352, 1.0
        %v1552 = vadd.f32 %v1354, 1.0
        %v1553 = vadd.f32 %v1356, 1.0
        %v1554 = vadd.f32 %v1358, 1.0
        %v1555 = vadd.f32 %v1360, 1.0
        %v1556 = vadd.f32 %v1362, 1.0
        %v1557 = vadd.f32 %v1364, 1.0
        %v1558 = vadd.f32 %v1366, 1.0
        %v1559 = vadd.f32 %v1368, 1.0
        %v1560 = vadd.f32 %v1370, 1.0
        %v1561 = vadd.f32 %v1372, 1.0
        %v1562 = vadd.f32 %v1374, 1.0
        %v1563 = vadd.f32 %v1376, 1.0
        %v1564 = vadd.f32 %v1378, 1.0
        %v1565 = vadd.f32 %v1380, 1.0
        %v1566 = vadd.f32 %v1382, 1.0
        %v1567 = vadd.f32 %v1384, 1.0
        %v1568 = vadd.f32 %v1386, 1.0
        %v1569 = vadd.f32 %v1388, 1.0
        %v1570 = vadd.f32 %v1390, 1.0
        %v1571 = vadd.f32 %v1392, 1.0
        %v1572 = vadd.f32 %v1394, 1.0
        %v1573 = vadd.f32 %v1396, 1.0
        %v1574 = vadd.f32 %v1398, 1.0
        %v1575 = vadd.f32 %v1400, 1.0
        %v1576 = vadd.f32 %v1402, 1.0
        %v1577 = vadd.f32 %v1404, 1.0
        %v1578 = vadd.f32 %v1406, 1.0
        %v1579 = vadd.f32 %v1408, 1.0
        %v1580 = vadd.f32 %v1410, 1.0
        %v1581 = vadd.f32 %v1412, 1.0
        %v1582 = vadd.f32 %v1414, 1.0
        %v1583 = vadd.f32 %v1416, 1.0
        %v1584 = vadd.f32 %v1418, 1.0
        %v1585 = vadd.f32 %v1420, 1.0
        %v1586 = vadd.f32 %v1422, 1.0
        %v1587 = vadd.f32 %v1424, 1.0
        %v1588 = vadd.f32 %v1426, 1.0
        %v1589 = vadd.f32 %v1428, 1.0
        %v1590 = vadd.f32 %v1430, 1.0
        %v1591 = vadd.f32 %v1432, 1.0
        %v1592 = vadd.f32 %v1434, 1.0
        %v1593 = vadd.f32 %v1436, 1.0
        %v1594 = vadd.f32 %v1438, 1.0
        %v1595 = vadd.f32 %v1440, 1.0
        %v1596 = vadd.f32 %v1442, 1.0
        %v1597 = vadd.f32 %v1444, 1.0
        %v1598 = vadd.f32 %v1446, 1.0
        %v1599 = vadd.f32 %v1448, 1.0
        %v1600 = vadd.f32 %v1450, 1.0
        %v1601 = vadd.f32 %v1452, 1.0
        %v1602 = vadd.f32 %v1454, 1.0
        %v1603 = vadd.f32 %v1456, 1.0
        %v1604 = vadd.f32 %v1458, 1.0
        %v1605 = vadd.f32 %v1460, 1.0
        %v1606 = vadd.f32 %v1462, 1.0
        %v1607 = vadd.f32 %v1464, 1.0
        %v1608 = vadd.f32 %v1466, 1.0
        %v1609 = vadd.f32 %v1468, 1.0
        %v1610 = vadd.f32 %v1470, 1.0
        %v1611 = vadd.f32 %v1472, 1.0
        %v1612 = vadd.f32 %v1474, 1.0
        %v1613 = vadd.f32 %v1476, 1.0
        %v1614 = vadd.f32 %v1478, 1.0
        %v1615 = vadd.f32 %v1480, 1.0
        %v1616 = vadd.f32 %v1482, 1.0
        %v1617 = vadd.f32 %v1484, 1.0
        %v1618 = vadd.f32 %v1486, 1.0
        %v1619 = vadd.f32 %v1488, 1.0
        %v1620 = vadd.f32 %v1490, 1.0
        %v1621 = vadd.f32 %v1492, 1.0
        %v1622 = vrcp.pop %v1493
        %v1623 = vmul.f32 1.0, %v1622
        %v1624 = vrcp.pop %v1494
        %v1625 = vmul.f32 1.0, %v1624
        %v1626 = vrcp.pop %v1495
        %v1627 = vmul.f32 1.0, %v1626
        %v1628 = vrcp.pop %v1496
        %v1629 = vmul.f32 1.0, %v1628
        %v1630 = vrcp.pop %v1497
        %v1631 = vmul.f32 1.0, %v1630
        %v1632 = vrcp.pop %v1498
        %v1633 = vmul.f32 1.0, %v1632
        %v1634 = vrcp.pop %v1499
        %v1635 = vmul.f32 1.0, %v1634
        %v1636 = vrcp.pop %v1500
        %v1637 = vmul.f32 1.0, %v1636
        %v1638 = vrcp.pop %v1501
        %v1639 = vmul.f32 1.0, %v1638
        %v1640 = vrcp.pop %v1502
        %v1641 = vmul.f32 1.0, %v1640
        %v1642 = vrcp.pop %v1503
        %v1643 = vmul.f32 1.0, %v1642
        %v1644 = vrcp.pop %v1504
        %v1645 = vmul.f32 1.0, %v1644
        %v1646 = vrcp.pop %v1505
        %v1647 = vmul.f32 1.0, %v1646
        %v1648 = vrcp.pop %v1506
        %v1649 = vmul.f32 1.0, %v1648
        %v1650 = vrcp.pop %v1507
        %v1651 = vmul.f32 1.0, %v1650
        %v1652 = vrcp.pop %v1508
        %v1653 = vmul.f32 1.0, %v1652
        %v1654 = vrcp.pop %v1509
        %v1655 = vmul.f32 1.0, %v1654
        %v1656 = vrcp.pop %v1510
        %v1657 = vmul.f32 1.0, %v1656
        %v1658 = vrcp.pop %v1511
        %v1659 = vmul.f32 1.0, %v1658
        %v1660 = vrcp.pop %v1512
        %v1661 = vmul.f32 1.0, %v1660
        %v1662 = vrcp.pop %v1513
        %v1663 = vmul.f32 1.0, %v1662
        %v1664 = vrcp.pop %v1514
        %v1665 = vmul.f32 1.0, %v1664
        %v1666 = vrcp.pop %v1515
        %v1667 = vmul.f32 1.0, %v1666
        %v1668 = vrcp.pop %v1516
        %v1669 = vmul.f32 1.0, %v1668
        %v1670 = vrcp.pop %v1517
        %v1671 = vmul.f32 1.0, %v1670
        %v1672 = vrcp.pop %v1518
        %v1673 = vmul.f32 1.0, %v1672
        %v1674 = vrcp.pop %v1519
        %v1675 = vmul.f32 1.0, %v1674
        %v1676 = vrcp.pop %v1520
        %v1677 = vmul.f32 1.0, %v1676
        %v1678 = vrcp.pop %v1521
        %v1679 = vmul.f32 1.0, %v1678
        %v1680 = vrcp.pop %v1522
        %v1681 = vmul.f32 1.0, %v1680
        %v1682 = vrcp.pop %v1523
        %v1683 = vmul.f32 1.0, %v1682
        %v1684 = vrcp.pop %v1524
        %v1685 = vmul.f32 1.0, %v1684
        %v1686 = vrcp.pop %v1525
        %v1687 = vmul.f32 1.0, %v1686
        %v1688 = vrcp.pop %v1526
        %v1689 = vmul.f32 1.0, %v1688
        %v1690 = vrcp.pop %v1527
        %v1691 = vmul.f32 1.0, %v1690
        %v1692 = vrcp.pop %v1528
        %v1693 = vmul.f32 1.0, %v1692
        %v1694 = vrcp.pop %v1529
        %v1695 = vmul.f32 1.0, %v1694
        %v1696 = vrcp.pop %v1530
        %v1697 = vmul.f32 1.0, %v1696
        %v1698 = vrcp.pop %v1531
        %v1699 = vmul.f32 1.0, %v1698
        %v1700 = vrcp.pop %v1532
        %v1701 = vmul.f32 1.0, %v1700
        %v1702 = vrcp.pop %v1533
        %v1703 = vmul.f32 1.0, %v1702
        %v1704 = vrcp.pop %v1534
        %v1705 = vmul.f32 1.0, %v1704
        %v1706 = vrcp.pop %v1535
        %v1707 = vmul.f32 1.0, %v1706
        %v1708 = vrcp.pop %v1536
        %v1709 = vmul.f32 1.0, %v1708
        %v1710 = vrcp.pop %v1537
        %v1711 = vmul.f32 1.0, %v1710
        %v1712 = vrcp.pop %v1538
        %v1713 = vmul.f32 1.0, %v1712
        %v1714 = vrcp.pop %v1539
        %v1715 = vmul.f32 1.0, %v1714
        %v1716 = vrcp.pop %v1540
        %v1717 = vmul.f32 1.0, %v1716
        %v1718 = vrcp.pop %v1541
        %v1719 = vmul.f32 1.0, %v1718
        %v1720 = vrcp.pop %v1542
        %v1721 = vmul.f32 1.0, %v1720
        %v1722 = vrcp.pop %v1543
        %v1723 = vmul.f32 1.0, %v1722
        %v1724 = vrcp.pop %v1544
        %v1725 = vmul.f32 1.0, %v1724
        %v1726 = vrcp.pop %v1545
        %v1727 = vmul.f32 1.0, %v1726
        %v1728 = vrcp.pop %v1546
        %v1729 = vmul.f32 1.0, %v1728
        %v1730 = vrcp.pop %v1547
        %v1731 = vmul.f32 1.0, %v1730
        %v1732 = vrcp.pop %v1548
        %v1733 = vmul.f32 1.0, %v1732
        %v1734 = vrcp.pop %v1549
        %v1735 = vmul.f32 1.0, %v1734
        %v1736 = vrcp.pop %v1550
        %v1737 = vmul.f32 1.0, %v1736
        %v1738 = vrcp.pop %v1551
        %v1739 = vmul.f32 1.0, %v1738
        %v1740 = vrcp.pop %v1552
        %v1741 = vmul.f32 1.0, %v1740
        %v1742 = vrcp.pop %v1553
        %v1743 = vmul.f32 1.0, %v1742
        %v1744 = vrcp.pop %v1554
        %v1745 = vmul.f32 1.0, %v1744
        %v1746 = vrcp.pop %v1555
        %v1747 = vmul.f32 1.0, %v1746
        %v1748 = vrcp.pop %v1556
        %v1749 = vmul.f32 1.0, %v1748
        %v1750 = vrcp.pop %v1557
        %v1751 = vmul.f32 1.0, %v1750
        %v1752 = vrcp.pop %v1558
        %v1753 = vmul.f32 1.0, %v1752
        %v1754 = vrcp.pop %v1559
        %v1755 = vmul.f32 1.0, %v1754
        %v1756 = vrcp.pop %v1560
        %v1757 = vmul.f32 1.0, %v1756
        %v1758 = vrcp.pop %v1561
        %v1759 = vmul.f32 1.0, %v1758
        %v1760 = vrcp.pop %v1562
        %v1761 = vmul.f32 1.0, %v1760
        %v1762 = vrcp.pop %v1563
        %v1763 = vmul.f32 1.0, %v1762
        %v1764 = vrcp.pop %v1564
        %v1765 = vmul.f32 1.0, %v1764
        %v1766 = vrcp.pop %v1565
        %v1767 = vmul.f32 1.0, %v1766
        %v1768 = vrcp.pop %v1566
        %v1769 = vmul.f32 1.0, %v1768
        %v1770 = vrcp.pop %v1567
        %v1771 = vmul.f32 1.0, %v1770
        %v1772 = vrcp.pop %v1568
        %v1773 = vmul.f32 1.0, %v1772
        %v1774 = vrcp.pop %v1569
        %v1775 = vmul.f32 1.0, %v1774
        %v1776 = vrcp.pop %v1570
        %v1777 = vmul.f32 1.0, %v1776
        %v1778 = vrcp.pop %v1571
        %v1779 = vmul.f32 1.0, %v1778
        %v1780 = vrcp.pop %v1572
        %v1781 = vmul.f32 1.0, %v1780
        %v1782 = vrcp.pop %v1573
        %v1783 = vmul.f32 1.0, %v1782
        %v1784 = vrcp.pop %v1574
        %v1785 = vmul.f32 1.0, %v1784
        %v1786 = vrcp.pop %v1575
        %v1787 = vmul.f32 1.0, %v1786
        %v1788 = vrcp.pop %v1576
        %v1789 = vmul.f32 1.0, %v1788
        %v1790 = vrcp.pop %v1577
        %v1791 = vmul.f32 1.0, %v1790
        %v1792 = vrcp.pop %v1578
        %v1793 = vmul.f32 1.0, %v1792
        %v1794 = vrcp.pop %v1579
        %v1795 = vmul.f32 1.0, %v1794
        %v1796 = vrcp.pop %v1580
        %v1797 = vmul.f32 1.0, %v1796
        %v1798 = vrcp.pop %v1581
        %v1799 = vmul.f32 1.0, %v1798
        %v1800 = vrcp.pop %v1582
        %v1801 = vmul.f32 1.0, %v1800
        %v1802 = vrcp.pop %v1583
        %v1803 = vmul.f32 1.0, %v1802
        %v1804 = vrcp.pop %v1584
        %v1805 = vmul.f32 1.0, %v1804
        %v1806 = vrcp.pop %v1585
        %v1807 = vmul.f32 1.0, %v1806
        %v1808 = vrcp.pop %v1586
        %v1809 = vmul.f32 1.0, %v1808
        %v1810 = vrcp.pop %v1587
        %v1811 = vmul.f32 1.0, %v1810
        %v1812 = vrcp.pop %v1588
        %v1813 = vmul.f32 1.0, %v1812
        %v1814 = vrcp.pop %v1589
        %v1815 = vmul.f32 1.0, %v1814
        %v1816 = vrcp.pop %v1590
        %v1817 = vmul.f32 1.0, %v1816
        %v1818 = vrcp.pop %v1591
        %v1819 = vmul.f32 1.0, %v1818
        %v1820 = vrcp.pop %v1592
        %v1821 = vmul.f32 1.0, %v1820
        %v1822 = vrcp.pop %v1593
        %v1823 = vmul.f32 1.0, %v1822
        %v1824 = vrcp.pop %v1594
        %v1825 = vmul.f32 1.0, %v1824
        %v1826 = vrcp.pop %v1595
        %v1827 = vmul.f32 1.0, %v1826
        %v1828 = vrcp.pop %v1596
        %v1829 = vmul.f32 1.0, %v1828
        %v1830 = vrcp.pop %v1597
        %v1831 = vmul.f32 1.0, %v1830
        %v1832 = vrcp.pop %v1598
        %v1833 = vmul.f32 1.0, %v1832
        %v1834 = vrcp.pop %v1599
        %v1835 = vmul.f32 1.0, %v1834
        %v1836 = vrcp.pop %v1600
        %v1837 = vmul.f32 1.0, %v1836
        %v1838 = vrcp.pop %v1601
        %v1839 = vmul.f32 1.0, %v1838
        %v1840 = vrcp.pop %v1602
        %v1841 = vmul.f32 1.0, %v1840
        %v1842 = vrcp.pop %v1603
        %v1843 = vmul.f32 1.0, %v1842
        %v1844 = vrcp.pop %v1604
        %v1845 = vmul.f32 1.0, %v1844
        %v1846 = vrcp.pop %v1605
        %v1847 = vmul.f32 1.0, %v1846
        %v1848 = vrcp.pop %v1606
        %v1849 = vmul.f32 1.0, %v1848
        %v1850 = vrcp.pop %v1607
        %v1851 = vmul.f32 1.0, %v1850
        %v1852 = vrcp.pop %v1608
        %v1853 = vmul.f32 1.0, %v1852
        %v1854 = vrcp.pop %v1609
        %v1855 = vmul.f32 1.0, %v1854
        %v1856 = vrcp.pop %v1610
        %v1857 = vmul.f32 1.0, %v1856
        %v1858 = vrcp.pop %v1611
        %v1859 = vmul.f32 1.0, %v1858
        %v1860 = vrcp.pop %v1612
        %v1861 = vmul.f32 1.0, %v1860
        %v1862 = vrcp.pop %v1613
        %v1863 = vmul.f32 1.0, %v1862
        %v1864 = vrcp.pop %v1614
        %v1865 = vmul.f32 1.0, %v1864
        %v1866 = vrcp.pop %v1615
        %v1867 = vmul.f32 1.0, %v1866
        %v1868 = vrcp.pop %v1616
        %v1869 = vmul.f32 1.0, %v1868
        %v1870 = vrcp.pop %v1617
        %v1871 = vmul.f32 1.0, %v1870
        %v1872 = vrcp.pop %v1618
        %v1873 = vmul.f32 1.0, %v1872
        %v1874 = vrcp.pop %v1619
        %v1875 = vmul.f32 1.0, %v1874
        %v1876 = vrcp.pop %v1620
        %v1877 = vmul.f32 1.0, %v1876
        %v1878 = vrcp.pop %v1621
        %v1879 = vmul.f32 1.0, %v1878
        %vm1880 = vcmp.ge.f32.partialorder %v848, 0.0
        %vm1881 = vcmp.ge.f32.partialorder %v849, 0.0
        %vm1882 = vcmp.ge.f32.partialorder %v850, 0.0
        %vm1883 = vcmp.ge.f32.partialorder %v851, 0.0
        %vm1884 = vcmp.ge.f32.partialorder %v852, 0.0
        %vm1885 = vcmp.ge.f32.partialorder %v853, 0.0
        %vm1886 = vcmp.ge.f32.partialorder %v854, 0.0
        %vm1887 = vcmp.ge.f32.partialorder %v855, 0.0
        %vm1888 = vcmp.ge.f32.partialorder %v856, 0.0
        %vm1889 = vcmp.ge.f32.partialorder %v857, 0.0
        %vm1890 = vcmp.ge.f32.partialorder %v858, 0.0
        %vm1891 = vcmp.ge.f32.partialorder %v859, 0.0
        %vm1892 = vcmp.ge.f32.partialorder %v860, 0.0
        %vm1893 = vcmp.ge.f32.partialorder %v861, 0.0
        %vm1894 = vcmp.ge.f32.partialorder %v862, 0.0
        %vm1895 = vcmp.ge.f32.partialorder %v863, 0.0
        %vm1896 = vcmp.ge.f32.partialorder %v864, 0.0
        %vm1897 = vcmp.ge.f32.partialorder %v865, 0.0
        %vm1898 = vcmp.ge.f32.partialorder %v866, 0.0
        %vm1899 = vcmp.ge.f32.partialorder %v867, 0.0
        %vm1900 = vcmp.ge.f32.partialorder %v868, 0.0
        %vm1901 = vcmp.ge.f32.partialorder %v869, 0.0
        %vm1902 = vcmp.ge.f32.partialorder %v870, 0.0
        %vm1903 = vcmp.ge.f32.partialorder %v871, 0.0
        %vm1904 = vcmp.ge.f32.partialorder %v872, 0.0
        %vm1905 = vcmp.ge.f32.partialorder %v873, 0.0
        %vm1906 = vcmp.ge.f32.partialorder %v874, 0.0
        %vm1907 = vcmp.ge.f32.partialorder %v875, 0.0
        %vm1908 = vcmp.ge.f32.partialorder %v876, 0.0
        %vm1909 = vcmp.ge.f32.partialorder %v877, 0.0
        %vm1910 = vcmp.ge.f32.partialorder %v878, 0.0
        %vm1911 = vcmp.ge.f32.partialorder %v879, 0.0
        %vm1912 = vcmp.ge.f32.partialorder %v880, 0.0
        %vm1913 = vcmp.ge.f32.partialorder %v881, 0.0
        %vm1914 = vcmp.ge.f32.partialorder %v882, 0.0
        %vm1915 = vcmp.ge.f32.partialorder %v883, 0.0
        %vm1916 = vcmp.ge.f32.partialorder %v884, 0.0
        %vm1917 = vcmp.ge.f32.partialorder %v885, 0.0
        %vm1918 = vcmp.ge.f32.partialorder %v886, 0.0
        %vm1919 = vcmp.ge.f32.partialorder %v887, 0.0
        %vm1920 = vcmp.ge.f32.partialorder %v888, 0.0
        %vm1921 = vcmp.ge.f32.partialorder %v889, 0.0
        %vm1922 = vcmp.ge.f32.partialorder %v890, 0.0
        %vm1923 = vcmp.ge.f32.partialorder %v891, 0.0
        %vm1924 = vcmp.ge.f32.partialorder %v892, 0.0
        %vm1925 = vcmp.ge.f32.partialorder %v893, 0.0
        %vm1926 = vcmp.ge.f32.partialorder %v894, 0.0
        %vm1927 = vcmp.ge.f32.partialorder %v895, 0.0
        %vm1928 = vcmp.ge.f32.partialorder %v896, 0.0
        %vm1929 = vcmp.ge.f32.partialorder %v897, 0.0
        %vm1930 = vcmp.ge.f32.partialorder %v898, 0.0
        %vm1931 = vcmp.ge.f32.partialorder %v899, 0.0
        %vm1932 = vcmp.ge.f32.partialorder %v900, 0.0
        %vm1933 = vcmp.ge.f32.partialorder %v901, 0.0
        %vm1934 = vcmp.ge.f32.partialorder %v902, 0.0
        %vm1935 = vcmp.ge.f32.partialorder %v903, 0.0
        %vm1936 = vcmp.ge.f32.partialorder %v904, 0.0
        %vm1937 = vcmp.ge.f32.partialorder %v905, 0.0
        %vm1938 = vcmp.ge.f32.partialorder %v906, 0.0
        %vm1939 = vcmp.ge.f32.partialorder %v907, 0.0
        %vm1940 = vcmp.ge.f32.partialorder %v908, 0.0
        %vm1941 = vcmp.ge.f32.partialorder %v909, 0.0
        %vm1942 = vcmp.ge.f32.partialorder %v910, 0.0
        %vm1943 = vcmp.ge.f32.partialorder %v911, 0.0
        %vm1944 = vcmp.ge.f32.partialorder %v912, 0.0
        %vm1945 = vcmp.ge.f32.partialorder %v913, 0.0
        %vm1946 = vcmp.ge.f32.partialorder %v914, 0.0
        %vm1947 = vcmp.ge.f32.partialorder %v915, 0.0
        %vm1948 = vcmp.ge.f32.partialorder %v916, 0.0
        %vm1949 = vcmp.ge.f32.partialorder %v917, 0.0
        %vm1950 = vcmp.ge.f32.partialorder %v918, 0.0
        %vm1951 = vcmp.ge.f32.partialorder %v919, 0.0
        %vm1952 = vcmp.ge.f32.partialorder %v920, 0.0
        %vm1953 = vcmp.ge.f32.partialorder %v921, 0.0
        %vm1954 = vcmp.ge.f32.partialorder %v922, 0.0
        %vm1955 = vcmp.ge.f32.partialorder %v923, 0.0
        %vm1956 = vcmp.ge.f32.partialorder %v924, 0.0
        %vm1957 = vcmp.ge.f32.partialorder %v925, 0.0
        %vm1958 = vcmp.ge.f32.partialorder %v926, 0.0
        %vm1959 = vcmp.ge.f32.partialorder %v927, 0.0
        %vm1960 = vcmp.ge.f32.partialorder %v928, 0.0
        %vm1961 = vcmp.ge.f32.partialorder %v929, 0.0
        %vm1962 = vcmp.ge.f32.partialorder %v930, 0.0
        %vm1963 = vcmp.ge.f32.partialorder %v931, 0.0
        %vm1964 = vcmp.ge.f32.partialorder %v932, 0.0
        %vm1965 = vcmp.ge.f32.partialorder %v933, 0.0
        %vm1966 = vcmp.ge.f32.partialorder %v934, 0.0
        %vm1967 = vcmp.ge.f32.partialorder %v935, 0.0
        %vm1968 = vcmp.ge.f32.partialorder %v936, 0.0
        %vm1969 = vcmp.ge.f32.partialorder %v937, 0.0
        %vm1970 = vcmp.ge.f32.partialorder %v938, 0.0
        %vm1971 = vcmp.ge.f32.partialorder %v939, 0.0
        %vm1972 = vcmp.ge.f32.partialorder %v940, 0.0
        %vm1973 = vcmp.ge.f32.partialorder %v941, 0.0
        %vm1974 = vcmp.ge.f32.partialorder %v942, 0.0
        %vm1975 = vcmp.ge.f32.partialorder %v943, 0.0
        %vm1976 = vcmp.ge.f32.partialorder %v944, 0.0
        %vm1977 = vcmp.ge.f32.partialorder %v945, 0.0
        %vm1978 = vcmp.ge.f32.partialorder %v946, 0.0
        %vm1979 = vcmp.ge.f32.partialorder %v947, 0.0
        %vm1980 = vcmp.ge.f32.partialorder %v948, 0.0
        %vm1981 = vcmp.ge.f32.partialorder %v949, 0.0
        %vm1982 = vcmp.ge.f32.partialorder %v950, 0.0
        %vm1983 = vcmp.ge.f32.partialorder %v951, 0.0
        %vm1984 = vcmp.ge.f32.partialorder %v952, 0.0
        %vm1985 = vcmp.ge.f32.partialorder %v953, 0.0
        %vm1986 = vcmp.ge.f32.partialorder %v954, 0.0
        %vm1987 = vcmp.ge.f32.partialorder %v955, 0.0
        %vm1988 = vcmp.ge.f32.partialorder %v956, 0.0
        %vm1989 = vcmp.ge.f32.partialorder %v957, 0.0
        %vm1990 = vcmp.ge.f32.partialorder %v958, 0.0
        %vm1991 = vcmp.ge.f32.partialorder %v959, 0.0
        %vm1992 = vcmp.ge.f32.partialorder %v960, 0.0
        %vm1993 = vcmp.ge.f32.partialorder %v961, 0.0
        %vm1994 = vcmp.ge.f32.partialorder %v962, 0.0
        %vm1995 = vcmp.ge.f32.partialorder %v963, 0.0
        %vm1996 = vcmp.ge.f32.partialorder %v964, 0.0
        %vm1997 = vcmp.ge.f32.partialorder %v965, 0.0
        %vm1998 = vcmp.ge.f32.partialorder %v966, 0.0
        %vm1999 = vcmp.ge.f32.partialorder %v967, 0.0
        %vm2000 = vcmp.ge.f32.partialorder %v968, 0.0
        %vm2001 = vcmp.ge.f32.partialorder %v969, 0.0
        %vm2002 = vcmp.ge.f32.partialorder %v970, 0.0
        %vm2003 = vcmp.ge.f32.partialorder %v971, 0.0
        %vm2004 = vcmp.ge.f32.partialorder %v972, 0.0
        %vm2005 = vcmp.ge.f32.partialorder %v973, 0.0
        %vm2006 = vcmp.ge.f32.partialorder %v974, 0.0
        %vm2007 = vcmp.ge.f32.partialorder %v975, 0.0
        %vm2008 = vcmp.ge.f32.partialorder %v976, 0.0
        %v2009 = vmul.f32 %v1236, %v1623
        %v2010 = vmul.f32 %v1238, %v1625
        %v2011 = vmul.f32 %v1240, %v1627
        %v2012 = vmul.f32 %v1242, %v1629
        %v2013 = vmul.f32 %v1244, %v1631
        %v2014 = vmul.f32 %v1246, %v1633
        %v2015 = vmul.f32 %v1248, %v1635
        %v2016 = vmul.f32 %v1250, %v1637
        %v2017 = vmul.f32 %v1252, %v1639
        %v2018 = vmul.f32 %v1254, %v1641
        %v2019 = vmul.f32 %v1256, %v1643
        %v2020 = vmul.f32 %v1258, %v1645
        %v2021 = vmul.f32 %v1260, %v1647
        %v2022 = vmul.f32 %v1262, %v1649
        %v2023 = vmul.f32 %v1264, %v1651
        %v2024 = vmul.f32 %v1266, %v1653
        %v2025 = vmul.f32 %v1268, %v1655
        %v2026 = vmul.f32 %v1270, %v1657
        %v2027 = vmul.f32 %v1272, %v1659
        %v2028 = vmul.f32 %v1274, %v1661
        %v2029 = vmul.f32 %v1276, %v1663
        %v2030 = vmul.f32 %v1278, %v1665
        %v2031 = vmul.f32 %v1280, %v1667
        %v2032 = vmul.f32 %v1282, %v1669
        %v2033 = vmul.f32 %v1284, %v1671
        %v2034 = vmul.f32 %v1286, %v1673
        %v2035 = vmul.f32 %v1288, %v1675
        %v2036 = vmul.f32 %v1290, %v1677
        %v2037 = vmul.f32 %v1292, %v1679
        %v2038 = vmul.f32 %v1294, %v1681
        %v2039 = vmul.f32 %v1296, %v1683
        %v2040 = vmul.f32 %v1298, %v1685
        %v2041 = vmul.f32 %v1300, %v1687
        %v2042 = vmul.f32 %v1302, %v1689
        %v2043 = vmul.f32 %v1304, %v1691
        %v2044 = vmul.f32 %v1306, %v1693
        %v2045 = vmul.f32 %v1308, %v1695
        %v2046 = vmul.f32 %v1310, %v1697
        %v2047 = vmul.f32 %v1312, %v1699
        %v2048 = vmul.f32 %v1314, %v1701
        %v2049 = vmul.f32 %v1316, %v1703
        %v2050 = vmul.f32 %v1318, %v1705
        %v2051 = vmul.f32 %v1320, %v1707
        %v2052 = vmul.f32 %v1322, %v1709
        %v2053 = vmul.f32 %v1324, %v1711
        %v2054 = vmul.f32 %v1326, %v1713
        %v2055 = vmul.f32 %v1328, %v1715
        %v2056 = vmul.f32 %v1330, %v1717
        %v2057 = vmul.f32 %v1332, %v1719
        %v2058 = vmul.f32 %v1334, %v1721
        %v2059 = vmul.f32 %v1336, %v1723
        %v2060 = vmul.f32 %v1338, %v1725
        %v2061 = vmul.f32 %v1340, %v1727
        %v2062 = vmul.f32 %v1342, %v1729
        %v2063 = vmul.f32 %v1344, %v1731
        %v2064 = vmul.f32 %v1346, %v1733
        %v2065 = vmul.f32 %v1348, %v1735
        %v2066 = vmul.f32 %v1350, %v1737
        %v2067 = vmul.f32 %v1352, %v1739
        %v2068 = vmul.f32 %v1354, %v1741
        %v2069 = vmul.f32 %v1356, %v1743
        %v2070 = vmul.f32 %v1358, %v1745
        %v2071 = vmul.f32 %v1360, %v1747
        %v2072 = vmul.f32 %v1362, %v1749
        %v2073 = vmul.f32 %v1364, %v1751
        %v2074 = vmul.f32 %v1366, %v1753
        %v2075 = vmul.f32 %v1368, %v1755
        %v2076 = vmul.f32 %v1370, %v1757
        %v2077 = vmul.f32 %v1372, %v1759
        %v2078 = vmul.f32 %v1374, %v1761
        %v2079 = vmul.f32 %v1376, %v1763
        %v2080 = vmul.f32 %v1378, %v1765
        %v2081 = vmul.f32 %v1380, %v1767
        %v2082 = vmul.f32 %v1382, %v1769
        %v2083 = vmul.f32 %v1384, %v1771
        %v2084 = vmul.f32 %v1386, %v1773
        %v2085 = vmul.f32 %v1388, %v1775
        %v2086 = vmul.f32 %v1390, %v1777
        %v2087 = vmul.f32 %v1392, %v1779
        %v2088 = vmul.f32 %v1394, %v1781
        %v2089 = vmul.f32 %v1396, %v1783
        %v2090 = vmul.f32 %v1398, %v1785
        %v2091 = vmul.f32 %v1400, %v1787
        %v2092 = vmul.f32 %v1402, %v1789
        %v2093 = vmul.f32 %v1404, %v1791
        %v2094 = vmul.f32 %v1406, %v1793
        %v2095 = vmul.f32 %v1408, %v1795
        %v2096 = vmul.f32 %v1410, %v1797
        %v2097 = vmul.f32 %v1412, %v1799
        %v2098 = vmul.f32 %v1414, %v1801
        %v2099 = vmul.f32 %v1416, %v1803
        %v2100 = vmul.f32 %v1418, %v1805
        %v2101 = vmul.f32 %v1420, %v1807
        %v2102 = vmul.f32 %v1422, %v1809
        %v2103 = vmul.f32 %v1424, %v1811
        %v2104 = vmul.f32 %v1426, %v1813
        %v2105 = vmul.f32 %v1428, %v1815
        %v2106 = vmul.f32 %v1430, %v1817
        %v2107 = vmul.f32 %v1432, %v1819
        %v2108 = vmul.f32 %v1434, %v1821
        %v2109 = vmul.f32 %v1436, %v1823
        %v2110 = vmul.f32 %v1438, %v1825
        %v2111 = vmul.f32 %v1440, %v1827
        %v2112 = vmul.f32 %v1442, %v1829
        %v2113 = vmul.f32 %v1444, %v1831
        %v2114 = vmul.f32 %v1446, %v1833
        %v2115 = vmul.f32 %v1448, %v1835
        %v2116 = vmul.f32 %v1450, %v1837
        %v2117 = vmul.f32 %v1452, %v1839
        %v2118 = vmul.f32 %v1454, %v1841
        %v2119 = vmul.f32 %v1456, %v1843
        %v2120 = vmul.f32 %v1458, %v1845
        %v2121 = vmul.f32 %v1460, %v1847
        %v2122 = vmul.f32 %v1462, %v1849
        %v2123 = vmul.f32 %v1464, %v1851
        %v2124 = vmul.f32 %v1466, %v1853
        %v2125 = vmul.f32 %v1468, %v1855
        %v2126 = vmul.f32 %v1470, %v1857
        %v2127 = vmul.f32 %v1472, %v1859
        %v2128 = vmul.f32 %v1474, %v1861
        %v2129 = vmul.f32 %v1476, %v1863
        %v2130 = vmul.f32 %v1478, %v1865
        %v2131 = vmul.f32 %v1480, %v1867
        %v2132 = vmul.f32 %v1482, %v1869
        %v2133 = vmul.f32 %v1484, %v1871
        %v2134 = vmul.f32 %v1486, %v1873
        %v2135 = vmul.f32 %v1488, %v1875
        %v2136 = vmul.f32 %v1490, %v1877
        %v2137 = vmul.f32 %v1492, %v1879
        %v2138 = vsel %vm1880, %v1623, %v2009
        %v2139 = vsel %vm1881, %v1625, %v2010
        %v2140 = vsel %vm1882, %v1627, %v2011
        %v2141 = vsel %vm1883, %v1629, %v2012
        %v2142 = vsel %vm1884, %v1631, %v2013
        %v2143 = vsel %vm1885, %v1633, %v2014
        %v2144 = vsel %vm1886, %v1635, %v2015
        %v2145 = vsel %vm1887, %v1637, %v2016
        %v2146 = vsel %vm1888, %v1639, %v2017
        %v2147 = vsel %vm1889, %v1641, %v2018
        %v2148 = vsel %vm1890, %v1643, %v2019
        %v2149 = vsel %vm1891, %v1645, %v2020
        %v2150 = vsel %vm1892, %v1647, %v2021
        %v2151 = vsel %vm1893, %v1649, %v2022
        %v2152 = vsel %vm1894, %v1651, %v2023
        %v2153 = vsel %vm1895, %v1653, %v2024
        %v2154 = vsel %vm1896, %v1655, %v2025
        %v2155 = vsel %vm1897, %v1657, %v2026
        %v2156 = vsel %vm1898, %v1659, %v2027
        %v2157 = vsel %vm1899, %v1661, %v2028
        %v2158 = vsel %vm1900, %v1663, %v2029
        %v2159 = vsel %vm1901, %v1665, %v2030
        %v2160 = vsel %vm1902, %v1667, %v2031
        %v2161 = vsel %vm1903, %v1669, %v2032
        %v2162 = vsel %vm1904, %v1671, %v2033
        %v2163 = vsel %vm1905, %v1673, %v2034
        %v2164 = vsel %vm1906, %v1675, %v2035
        %v2165 = vsel %vm1907, %v1677, %v2036
        %v2166 = vsel %vm1908, %v1679, %v2037
        %v2167 = vsel %vm1909, %v1681, %v2038
        %v2168 = vsel %vm1910, %v1683, %v2039
        %v2169 = vsel %vm1911, %v1685, %v2040
        %v2170 = vsel %vm1912, %v1687, %v2041
        %v2171 = vsel %vm1913, %v1689, %v2042
        %v2172 = vsel %vm1914, %v1691, %v2043
        %v2173 = vsel %vm1915, %v1693, %v2044
        %v2174 = vsel %vm1916, %v1695, %v2045
        %v2175 = vsel %vm1917, %v1697, %v2046
        %v2176 = vsel %vm1918, %v1699, %v2047
        %v2177 = vsel %vm1919, %v1701, %v2048
        %v2178 = vsel %vm1920, %v1703, %v2049
        %v2179 = vsel %vm1921, %v1705, %v2050
        %v2180 = vsel %vm1922, %v1707, %v2051
        %v2181 = vsel %vm1923, %v1709, %v2052
        %v2182 = vsel %vm1924, %v1711, %v2053
        %v2183 = vsel %vm1925, %v1713, %v2054
        %v2184 = vsel %vm1926, %v1715, %v2055
        %v2185 = vsel %vm1927, %v1717, %v2056
        %v2186 = vsel %vm1928, %v1719, %v2057
        %v2187 = vsel %vm1929, %v1721, %v2058
        %v2188 = vsel %vm1930, %v1723, %v2059
        %v2189 = vsel %vm1931, %v1725, %v2060
        %v2190 = vsel %vm1932, %v1727, %v2061
        %v2191 = vsel %vm1933, %v1729, %v2062
        %v2192 = vsel %vm1934, %v1731, %v2063
        %v2193 = vsel %vm1935, %v1733, %v2064
        %v2194 = vsel %vm1936, %v1735, %v2065
        %v2195 = vsel %vm1937, %v1737, %v2066
        %v2196 = vsel %vm1938, %v1739, %v2067
        %v2197 = vsel %vm1939, %v1741, %v2068
        %v2198 = vsel %vm1940, %v1743, %v2069
        %v2199 = vsel %vm1941, %v1745, %v2070
        %v2200 = vsel %vm1942, %v1747, %v2071
        %v2201 = vsel %vm1943, %v1749, %v2072
        %v2202 = vsel %vm1944, %v1751, %v2073
        %v2203 = vsel %vm1945, %v1753, %v2074
        %v2204 = vsel %vm1946, %v1755, %v2075
        %v2205 = vsel %vm1947, %v1757, %v2076
        %v2206 = vsel %vm1948, %v1759, %v2077
        %v2207 = vsel %vm1949, %v1761, %v2078
        %v2208 = vsel %vm1950, %v1763, %v2079
        %v2209 = vsel %vm1951, %v1765, %v2080
        %v2210 = vsel %vm1952, %v1767, %v2081
        %v2211 = vsel %vm1953, %v1769, %v2082
        %v2212 = vsel %vm1954, %v1771, %v2083
        %v2213 = vsel %vm1955, %v1773, %v2084
        %v2214 = vsel %vm1956, %v1775, %v2085
        %v2215 = vsel %vm1957, %v1777, %v2086
        %v2216 = vsel %vm1958, %v1779, %v2087
        %v2217 = vsel %vm1959, %v1781, %v2088
        %v2218 = vsel %vm1960, %v1783, %v2089
        %v2219 = vsel %vm1961, %v1785, %v2090
        %v2220 = vsel %vm1962, %v1787, %v2091
        %v2221 = vsel %vm1963, %v1789, %v2092
        %v2222 = vsel %vm1964, %v1791, %v2093
        %v2223 = vsel %vm1965, %v1793, %v2094
        %v2224 = vsel %vm1966, %v1795, %v2095
        %v2225 = vsel %vm1967, %v1797, %v2096
        %v2226 = vsel %vm1968, %v1799, %v2097
        %v2227 = vsel %vm1969, %v1801, %v2098
        %v2228 = vsel %vm1970, %v1803, %v2099
        %v2229 = vsel %vm1971, %v1805, %v2100
        %v2230 = vsel %vm1972, %v1807, %v2101
        %v2231 = vsel %vm1973, %v1809, %v2102
        %v2232 = vsel %vm1974, %v1811, %v2103
        %v2233 = vsel %vm1975, %v1813, %v2104
        %v2234 = vsel %vm1976, %v1815, %v2105
        %v2235 = vsel %vm1977, %v1817, %v2106
        %v2236 = vsel %vm1978, %v1819, %v2107
        %v2237 = vsel %vm1979, %v1821, %v2108
        %v2238 = vsel %vm1980, %v1823, %v2109
        %v2239 = vsel %vm1981, %v1825, %v2110
        %v2240 = vsel %vm1982, %v1827, %v2111
        %v2241 = vsel %vm1983, %v1829, %v2112
        %v2242 = vsel %vm1984, %v1831, %v2113
        %v2243 = vsel %vm1985, %v1833, %v2114
        %v2244 = vsel %vm1986, %v1835, %v2115
        %v2245 = vsel %vm1987, %v1837, %v2116
        %v2246 = vsel %vm1988, %v1839, %v2117
        %v2247 = vsel %vm1989, %v1841, %v2118
        %v2248 = vsel %vm1990, %v1843, %v2119
        %v2249 = vsel %vm1991, %v1845, %v2120
        %v2250 = vsel %vm1992, %v1847, %v2121
        %v2251 = vsel %vm1993, %v1849, %v2122
        %v2252 = vsel %vm1994, %v1851, %v2123
        %v2253 = vsel %vm1995, %v1853, %v2124
        %v2254 = vsel %vm1996, %v1855, %v2125
        %v2255 = vsel %vm1997, %v1857, %v2126
        %v2256 = vsel %vm1998, %v1859, %v2127
        %v2257 = vsel %vm1999, %v1861, %v2128
        %v2258 = vsel %vm2000, %v1863, %v2129
        %v2259 = vsel %vm2001, %v1865, %v2130
        %v2260 = vsel %vm2002, %v1867, %v2131
        %v2261 = vsel %vm2003, %v1869, %v2132
        %v2262 = vsel %vm2004, %v1871, %v2133
        %v2263 = vsel %vm2005, %v1873, %v2134
        %v2264 = vsel %vm2006, %v1875, %v2135
        %v2265 = vsel %vm2007, %v1877, %v2136
        %v2266 = vsel %vm2008, %v1879, %v2137
        %vm2267 = vcmask 7168
        %2268 = vst.msk [vmem:[%s173] sm:$0xff] %vm2267, %v2138
        %2269 = vst.msk [vmem:[%s173 + $0x8] sm:$0xff] %vm2267, %v2139
        %2270 = vst.msk [vmem:[%s173 + $0x10] sm:$0xff] %vm2267, %v2140
        %2271 = vst.msk [vmem:[%s173 + $0x18] sm:$0xff] %vm2267, %v2141
        %2272 = vst.msk [vmem:[%s173 + $0x20] sm:$0xff] %vm2267, %v2142
        %2273 = vst.msk [vmem:[%s173 + $0x28] sm:$0xff] %vm2267, %v2143
        %2274 = vst.msk [vmem:[%s173 + $0x30] sm:$0xff] %vm2267, %v2144
        %2275 = vst.msk [vmem:[%s173 + $0x38] sm:$0xff] %vm2267, %v2145
        %2276 = vst.msk [vmem:[%s173 + $0x40] sm:$0xff] %vm2267, %v2146
        %2277 = vst.msk [vmem:[%s173 + $0x48] sm:$0xff] %vm2267, %v2147
        %2278 = vst.msk [vmem:[%s173 + $0x50] sm:$0xff] %vm2267, %v2148
        %2279 = vst.msk [vmem:[%s173 + $0x58] sm:$0xff] %vm2267, %v2149
        %2280 = vst.msk [vmem:[%s173 + $0x60] sm:$0xff] %vm2267, %v2150
        %2281 = vst.msk [vmem:[%s173 + $0x68] sm:$0xff] %vm2267, %v2151
        %2282 = vst.msk [vmem:[%s173 + $0x70] sm:$0xff] %vm2267, %v2152
        %2283 = vst.msk [vmem:[%s173 + $0x78] sm:$0xff] %vm2267, %v2153
        %2284 = vst.msk [vmem:[%s173 + $0x80] sm:$0xff] %vm2267, %v2154
        %2285 = vst.msk [vmem:[%s173 + $0x88] sm:$0xff] %vm2267, %v2155
        %2286 = vst.msk [vmem:[%s173 + $0x90] sm:$0xff] %vm2267, %v2156
        %2287 = vst.msk [vmem:[%s173 + $0x98] sm:$0xff] %vm2267, %v2157
        %2288 = vst.msk [vmem:[%s173 + $0xa0] sm:$0xff] %vm2267, %v2158
        %2289 = vst.msk [vmem:[%s173 + $0xa8] sm:$0xff] %vm2267, %v2159
        %2290 = vst.msk [vmem:[%s173 + $0xb0] sm:$0xff] %vm2267, %v2160
        %2291 = vst.msk [vmem:[%s173 + $0xb8] sm:$0xff] %vm2267, %v2161
        %2292 = vst.msk [vmem:[%s173 + $0xc0] sm:$0xff] %vm2267, %v2162
        %2293 = vst.msk [vmem:[%s173 + $0xc8] sm:$0xff] %vm2267, %v2163
        %2294 = vst.msk [vmem:[%s173 + $0xd0] sm:$0xff] %vm2267, %v2164
        %2295 = vst.msk [vmem:[%s173 + $0xd8] sm:$0xff] %vm2267, %v2165
        %2296 = vst.msk [vmem:[%s173 + $0xe0] sm:$0xff] %vm2267, %v2166
        %2297 = vst.msk [vmem:[%s173 + $0xe8] sm:$0xff] %vm2267, %v2167
        %2298 = vst.msk [vmem:[%s173 + $0xf0] sm:$0xff] %vm2267, %v2168
        %2299 = vst.msk [vmem:[%s173 + $0xf8] sm:$0xff] %vm2267, %v2169
        %2300 = vst.msk [vmem:[%s173 + $0x100] sm:$0xff] %vm2267, %v2170
        %2301 = vst.msk [vmem:[%s173 + $0x108] sm:$0xff] %vm2267, %v2171
        %2302 = vst.msk [vmem:[%s173 + $0x110] sm:$0xff] %vm2267, %v2172
        %2303 = vst.msk [vmem:[%s173 + $0x118] sm:$0xff] %vm2267, %v2173
        %2304 = vst.msk [vmem:[%s173 + $0x120] sm:$0xff] %vm2267, %v2174
        %2305 = vst.msk [vmem:[%s173 + $0x128] sm:$0xff] %vm2267, %v2175
        %2306 = vst.msk [vmem:[%s173 + $0x130] sm:$0xff] %vm2267, %v2176
        %2307 = vst.msk [vmem:[%s173 + $0x138] sm:$0xff] %vm2267, %v2177
        %2308 = vst.msk [vmem:[%s173 + $0x140] sm:$0xff] %vm2267, %v2178
        %2309 = vst.msk [vmem:[%s173 + $0x148] sm:$0xff] %vm2267, %v2179
        %2310 = vst.msk [vmem:[%s173 + $0x150] sm:$0xff] %vm2267, %v2180
        %2311 = vst.msk [vmem:[%s173 + $0x158] sm:$0xff] %vm2267, %v2181
        %2312 = vst.msk [vmem:[%s173 + $0x160] sm:$0xff] %vm2267, %v2182
        %2313 = vst.msk [vmem:[%s173 + $0x168] sm:$0xff] %vm2267, %v2183
        %2314 = vst.msk [vmem:[%s173 + $0x170] sm:$0xff] %vm2267, %v2184
        %2315 = vst.msk [vmem:[%s173 + $0x178] sm:$0xff] %vm2267, %v2185
        %2316 = vst.msk [vmem:[%s173 + $0x180] sm:$0xff] %vm2267, %v2186
        %2317 = vst.msk [vmem:[%s173 + $0x188] sm:$0xff] %vm2267, %v2187
        %2318 = vst.msk [vmem:[%s173 + $0x190] sm:$0xff] %vm2267, %v2188
        %2319 = vst.msk [vmem:[%s173 + $0x198] sm:$0xff] %vm2267, %v2189
        %2320 = vst.msk [vmem:[%s173 + $0x1a0] sm:$0xff] %vm2267, %v2190
        %2321 = vst.msk [vmem:[%s173 + $0x1a8] sm:$0xff] %vm2267, %v2191
        %2322 = vst.msk [vmem:[%s173 + $0x1b0] sm:$0xff] %vm2267, %v2192
        %2323 = vst.msk [vmem:[%s173 + $0x1b8] sm:$0xff] %vm2267, %v2193
        %2324 = vst.msk [vmem:[%s173 + $0x1c0] sm:$0xff] %vm2267, %v2194
        %2325 = vst.msk [vmem:[%s173 + $0x1c8] sm:$0xff] %vm2267, %v2195
        %2326 = vst.msk [vmem:[%s173 + $0x1d0] sm:$0xff] %vm2267, %v2196
        %2327 = vst.msk [vmem:[%s173 + $0x1d8] sm:$0xff] %vm2267, %v2197
        %2328 = vst.msk [vmem:[%s173 + $0x1e0] sm:$0xff] %vm2267, %v2198
        %2329 = vst.msk [vmem:[%s173 + $0x1e8] sm:$0xff] %vm2267, %v2199
        %2330 = vst.msk [vmem:[%s173 + $0x1f0] sm:$0xff] %vm2267, %v2200
        %2331 = vst.msk [vmem:[%s173 + $0x1f8] sm:$0xff] %vm2267, %v2201
        %2332 = vst.msk [vmem:[%s173 + $0x200] sm:$0xff] %vm2267, %v2202
        %2333 = vst.msk [vmem:[%s173 + $0x208] sm:$0xff] %vm2267, %v2203
        %2334 = vst.msk [vmem:[%s173 + $0x210] sm:$0xff] %vm2267, %v2204
        %2335 = vst.msk [vmem:[%s173 + $0x218] sm:$0xff] %vm2267, %v2205
        %2336 = vst.msk [vmem:[%s173 + $0x220] sm:$0xff] %vm2267, %v2206
        %2337 = vst.msk [vmem:[%s173 + $0x228] sm:$0xff] %vm2267, %v2207
        %2338 = vst.msk [vmem:[%s173 + $0x230] sm:$0xff] %vm2267, %v2208
        %2339 = vst.msk [vmem:[%s173 + $0x238] sm:$0xff] %vm2267, %v2209
        %2340 = vst.msk [vmem:[%s173 + $0x240] sm:$0xff] %vm2267, %v2210
        %2341 = vst.msk [vmem:[%s173 + $0x248] sm:$0xff] %vm2267, %v2211
        %2342 = vst.msk [vmem:[%s173 + $0x250] sm:$0xff] %vm2267, %v2212
        %2343 = vst.msk [vmem:[%s173 + $0x258] sm:$0xff] %vm2267, %v2213
        %2344 = vst.msk [vmem:[%s173 + $0x260] sm:$0xff] %vm2267, %v2214
        %2345 = vst.msk [vmem:[%s173 + $0x268] sm:$0xff] %vm2267, %v2215
        %2346 = vst.msk [vmem:[%s173 + $0x270] sm:$0xff] %vm2267, %v2216
        %2347 = vst.msk [vmem:[%s173 + $0x278] sm:$0xff] %vm2267, %v2217
        %2348 = vst.msk [vmem:[%s173 + $0x280] sm:$0xff] %vm2267, %v2218
        %2349 = vst.msk [vmem:[%s173 + $0x288] sm:$0xff] %vm2267, %v2219
        %2350 = vst.msk [vmem:[%s173 + $0x290] sm:$0xff] %vm2267, %v2220
        %2351 = vst.msk [vmem:[%s173 + $0x298] sm:$0xff] %vm2267, %v2221
        %2352 = vst.msk [vmem:[%s173 + $0x2a0] sm:$0xff] %vm2267, %v2222
        %2353 = vst.msk [vmem:[%s173 + $0x2a8] sm:$0xff] %vm2267, %v2223
        %2354 = vst.msk [vmem:[%s173 + $0x2b0] sm:$0xff] %vm2267, %v2224
        %2355 = vst.msk [vmem:[%s173 + $0x2b8] sm:$0xff] %vm2267, %v2225
        %2356 = vst.msk [vmem:[%s173 + $0x2c0] sm:$0xff] %vm2267, %v2226
        %2357 = vst.msk [vmem:[%s173 + $0x2c8] sm:$0xff] %vm2267, %v2227
        %2358 = vst.msk [vmem:[%s173 + $0x2d0] sm:$0xff] %vm2267, %v2228
        %2359 = vst.msk [vmem:[%s173 + $0x2d8] sm:$0xff] %vm2267, %v2229
        %2360 = vst.msk [vmem:[%s173 + $0x2e0] sm:$0xff] %vm2267, %v2230
        %2361 = vst.msk [vmem:[%s173 + $0x2e8] sm:$0xff] %vm2267, %v2231
        %2362 = vst.msk [vmem:[%s173 + $0x2f0] sm:$0xff] %vm2267, %v2232
        %2363 = vst.msk [vmem:[%s173 + $0x2f8] sm:$0xff] %vm2267, %v2233
        %2364 = vst.msk [vmem:[%s173 + $0x300] sm:$0xff] %vm2267, %v2234
        %2365 = vst.msk [vmem:[%s173 + $0x308] sm:$0xff] %vm2267, %v2235
        %2366 = vst.msk [vmem:[%s173 + $0x310] sm:$0xff] %vm2267, %v2236
        %2367 = vst.msk [vmem:[%s173 + $0x318] sm:$0xff] %vm2267, %v2237
        %2368 = vst.msk [vmem:[%s173 + $0x320] sm:$0xff] %vm2267, %v2238
        %2369 = vst.msk [vmem:[%s173 + $0x328] sm:$0xff] %vm2267, %v2239
        %2370 = vst.msk [vmem:[%s173 + $0x330] sm:$0xff] %vm2267, %v2240
        %2371 = vst.msk [vmem:[%s173 + $0x338] sm:$0xff] %vm2267, %v2241
        %2372 = vst.msk [vmem:[%s173 + $0x340] sm:$0xff] %vm2267, %v2242
        %2373 = vst.msk [vmem:[%s173 + $0x348] sm:$0xff] %vm2267, %v2243
        %2374 = vst.msk [vmem:[%s173 + $0x350] sm:$0xff] %vm2267, %v2244
        %2375 = vst.msk [vmem:[%s173 + $0x358] sm:$0xff] %vm2267, %v2245
        %2376 = vst.msk [vmem:[%s173 + $0x360] sm:$0xff] %vm2267, %v2246
        %2377 = vst.msk [vmem:[%s173 + $0x368] sm:$0xff] %vm2267, %v2247
        %2378 = vst.msk [vmem:[%s173 + $0x370] sm:$0xff] %vm2267, %v2248
        %2379 = vst.msk [vmem:[%s173 + $0x378] sm:$0xff] %vm2267, %v2249
        %2380 = vst.msk [vmem:[%s173 + $0x380] sm:$0xff] %vm2267, %v2250
        %2381 = vst.msk [vmem:[%s173 + $0x388] sm:$0xff] %vm2267, %v2251
        %2382 = vst.msk [vmem:[%s173 + $0x390] sm:$0xff] %vm2267, %v2252
        %2383 = vst.msk [vmem:[%s173 + $0x398] sm:$0xff] %vm2267, %v2253
        %2384 = vst.msk [vmem:[%s173 + $0x3a0] sm:$0xff] %vm2267, %v2254
        %2385 = vst.msk [vmem:[%s173 + $0x3a8] sm:$0xff] %vm2267, %v2255
        %2386 = vst.msk [vmem:[%s173 + $0x3b0] sm:$0xff] %vm2267, %v2256
        %2387 = vst.msk [vmem:[%s173 + $0x3b8] sm:$0xff] %vm2267, %v2257
        %2388 = vst.msk [vmem:[%s173 + $0x3c0] sm:$0xff] %vm2267, %v2258
        %2389 = vst.msk [vmem:[%s173 + $0x3c8] sm:$0xff] %vm2267, %v2259
        %2390 = vst.msk [vmem:[%s173 + $0x3d0] sm:$0xff] %vm2267, %v2260
        %2391 = vst.msk [vmem:[%s173 + $0x3d8] sm:$0xff] %vm2267, %v2261
        %2392 = vst.msk [vmem:[%s173 + $0x3e0] sm:$0xff] %vm2267, %v2262
        %2393 = vst.msk [vmem:[%s173 + $0x3e8] sm:$0xff] %vm2267, %v2263
        %2394 = vst.msk [vmem:[%s173 + $0x3f0] sm:$0xff] %vm2267, %v2264
        %2395 = vst.msk [vmem:[%s173 + $0x3f8] sm:$0xff] %vm2267, %v2265
        %2396 = vst.msk [vmem:[%s173 + $0x400] sm:$0xff] %vm2267, %v2266
        %s2397 = sand.u32 %s91, 1
        %s2398 = sand.u32 %s91, 1
        %s2399 = smul.addr %s2398, 1032
        %s2400 = scalar_lea.vmem [#allocation3], %s2399
        // Predicated region
        $region33: #{tpu_custom_call.1} parent=31 // pred_check
          %p2401 = pneg %p101
        $region34: #{tpu_custom_call.1} parent=31 // pred_check_branch
          %2403 = sbr.rel (%p2401) target = $region36
        $region35: #{tpu_custom_call.1} parent=31 // pred_region
          %s2404 = smul.u32 129, %s15
          %s2405 = ssub.s32 257, %s2404
          %p2406 = scmp.lt.s32.totalorder %s2405, 129
          %s2407 = scalar_select %p2406, %s2405, 129
          %s2408 = smul.u32 128, %s2407
          %p2409 = scmp.ne.s32.totalorder 0, %s2408
          %s2410 = smul.addr %s2404, 8
          %s2411 = scalar_lea.vmem %s3, %s2410
          // Predicated region
          $region37: #{tpu_custom_call.1} parent=35 // pred_check
            %p2412 = pneg %p2409
          $region38: #{tpu_custom_call.1} parent=35 // pred_check_branch
            %2414 = sbr.rel (%p2412) target = $region40
          $region39: #{tpu_custom_call.1} parent=35 // pred_region
            // Predicated region
            $region41: #{tpu_custom_call.1} parent=39 // pred_check
              _
            $region42: #{tpu_custom_call.1} parent=39 // pred_check_branch
              %2416 = sbr.rel (0) target = $region44
            $region43: #{tpu_custom_call.1} parent=39 // pred_region
              // Predicated region
              $region63: #{tpu_custom_call.1} parent=43 // pred_check
                _
              $region64: #{tpu_custom_call.1} parent=43 // pred_check_branch
                %2592 = sbr.rel (0) target = $region66
              $region65: #{tpu_custom_call.1} parent=43 // pred_region
                %s2593 = sshrl.u32 %s2407, 6
                // While loop
                $region67: #{tpu_custom_call.1} parent=65 // loop_pre_header
                  _
                $region68: #{tpu_custom_call.1} parent=65 // loop_header
                  %s2595 = sphi 0, %s2597
                  %p2596 = scmp.ge.s32.totalorder %s2595, %s2593
                  %s2600 = sphi 0, %s2733
                  %s2601 = sphi %s2400, %s2736
                  %s2602 = sphi %s2411, %s2737
                $region69: #{tpu_custom_call.1} parent=65 // loop_header_branch
                  %2599 = sbr.rel (%p2596) target = $region73
                $region70: #{tpu_custom_call.1} parent=65 // loop_body
                  %v2603 = vld [vmem:[%s2601] sm:$0xff]
                  %2604 = vst [vmem:[%s2602] sm:$0xff] %v2603
                  %v2605 = vld [vmem:[%s2601 + $0x8] sm:$0xff]
                  %2606 = vst [vmem:[%s2602 + $0x8] sm:$0xff] %v2605
                  %v2607 = vld [vmem:[%s2601 + $0x10] sm:$0xff]
                  %2608 = vst [vmem:[%s2602 + $0x10] sm:$0xff] %v2607
                  %v2609 = vld [vmem:[%s2601 + $0x18] sm:$0xff]
                  %2610 = vst [vmem:[%s2602 + $0x18] sm:$0xff] %v2609
                  %v2611 = vld [vmem:[%s2601 + $0x20] sm:$0xff]
                  %2612 = vst [vmem:[%s2602 + $0x20] sm:$0xff] %v2611
                  %v2613 = vld [vmem:[%s2601 + $0x28] sm:$0xff]
                  %2614 = vst [vmem:[%s2602 + $0x28] sm:$0xff] %v2613
                  %v2615 = vld [vmem:[%s2601 + $0x30] sm:$0xff]
                  %2616 = vst [vmem:[%s2602 + $0x30] sm:$0xff] %v2615
                  %v2617 = vld [vmem:[%s2601 + $0x38] sm:$0xff]
                  %2618 = vst [vmem:[%s2602 + $0x38] sm:$0xff] %v2617
                  %v2619 = vld [vmem:[%s2601 + $0x40] sm:$0xff]
                  %2620 = vst [vmem:[%s2602 + $0x40] sm:$0xff] %v2619
                  %v2621 = vld [vmem:[%s2601 + $0x48] sm:$0xff]
                  %2622 = vst [vmem:[%s2602 + $0x48] sm:$0xff] %v2621
                  %v2623 = vld [vmem:[%s2601 + $0x50] sm:$0xff]
                  %2624 = vst [vmem:[%s2602 + $0x50] sm:$0xff] %v2623
                  %v2625 = vld [vmem:[%s2601 + $0x58] sm:$0xff]
                  %2626 = vst [vmem:[%s2602 + $0x58] sm:$0xff] %v2625
                  %v2627 = vld [vmem:[%s2601 + $0x60] sm:$0xff]
                  %2628 = vst [vmem:[%s2602 + $0x60] sm:$0xff] %v2627
                  %v2629 = vld [vmem:[%s2601 + $0x68] sm:$0xff]
                  %2630 = vst [vmem:[%s2602 + $0x68] sm:$0xff] %v2629
                  %v2631 = vld [vmem:[%s2601 + $0x70] sm:$0xff]
                  %2632 = vst [vmem:[%s2602 + $0x70] sm:$0xff] %v2631
                  %v2633 = vld [vmem:[%s2601 + $0x78] sm:$0xff]
                  %2634 = vst [vmem:[%s2602 + $0x78] sm:$0xff] %v2633
                  %v2635 = vld [vmem:[%s2601 + $0x80] sm:$0xff]
                  %2636 = vst [vmem:[%s2602 + $0x80] sm:$0xff] %v2635
                  %v2637 = vld [vmem:[%s2601 + $0x88] sm:$0xff]
                  %2638 = vst [vmem:[%s2602 + $0x88] sm:$0xff] %v2637
                  %v2639 = vld [vmem:[%s2601 + $0x90] sm:$0xff]
                  %2640 = vst [vmem:[%s2602 + $0x90] sm:$0xff] %v2639
                  %v2641 = vld [vmem:[%s2601 + $0x98] sm:$0xff]
                  %2642 = vst [vmem:[%s2602 + $0x98] sm:$0xff] %v2641
                  %v2643 = vld [vmem:[%s2601 + $0xa0] sm:$0xff]
                  %2644 = vst [vmem:[%s2602 + $0xa0] sm:$0xff] %v2643
                  %v2645 = vld [vmem:[%s2601 + $0xa8] sm:$0xff]
                  %2646 = vst [vmem:[%s2602 + $0xa8] sm:$0xff] %v2645
                  %v2647 = vld [vmem:[%s2601 + $0xb0] sm:$0xff]
                  %2648 = vst [vmem:[%s2602 + $0xb0] sm:$0xff] %v2647
                  %v2649 = vld [vmem:[%s2601 + $0xb8] sm:$0xff]
                  %2650 = vst [vmem:[%s2602 + $0xb8] sm:$0xff] %v2649
                  %v2651 = vld [vmem:[%s2601 + $0xc0] sm:$0xff]
                  %2652 = vst [vmem:[%s2602 + $0xc0] sm:$0xff] %v2651
                  %v2653 = vld [vmem:[%s2601 + $0xc8] sm:$0xff]
                  %2654 = vst [vmem:[%s2602 + $0xc8] sm:$0xff] %v2653
                  %v2655 = vld [vmem:[%s2601 + $0xd0] sm:$0xff]
                  %2656 = vst [vmem:[%s2602 + $0xd0] sm:$0xff] %v2655
                  %v2657 = vld [vmem:[%s2601 + $0xd8] sm:$0xff]
                  %2658 = vst [vmem:[%s2602 + $0xd8] sm:$0xff] %v2657
                  %v2659 = vld [vmem:[%s2601 + $0xe0] sm:$0xff]
                  %2660 = vst [vmem:[%s2602 + $0xe0] sm:$0xff] %v2659
                  %v2661 = vld [vmem:[%s2601 + $0xe8] sm:$0xff]
                  %2662 = vst [vmem:[%s2602 + $0xe8] sm:$0xff] %v2661
                  %v2663 = vld [vmem:[%s2601 + $0xf0] sm:$0xff]
                  %2664 = vst [vmem:[%s2602 + $0xf0] sm:$0xff] %v2663
                  %v2665 = vld [vmem:[%s2601 + $0xf8] sm:$0xff]
                  %2666 = vst [vmem:[%s2602 + $0xf8] sm:$0xff] %v2665
                  %v2667 = vld [vmem:[%s2601 + $0x100] sm:$0xff]
                  %2668 = vst [vmem:[%s2602 + $0x100] sm:$0xff] %v2667
                  %v2669 = vld [vmem:[%s2601 + $0x108] sm:$0xff]
                  %2670 = vst [vmem:[%s2602 + $0x108] sm:$0xff] %v2669
                  %v2671 = vld [vmem:[%s2601 + $0x110] sm:$0xff]
                  %2672 = vst [vmem:[%s2602 + $0x110] sm:$0xff] %v2671
                  %v2673 = vld [vmem:[%s2601 + $0x118] sm:$0xff]
                  %2674 = vst [vmem:[%s2602 + $0x118] sm:$0xff] %v2673
                  %v2675 = vld [vmem:[%s2601 + $0x120] sm:$0xff]
                  %2676 = vst [vmem:[%s2602 + $0x120] sm:$0xff] %v2675
                  %v2677 = vld [vmem:[%s2601 + $0x128] sm:$0xff]
                  %2678 = vst [vmem:[%s2602 + $0x128] sm:$0xff] %v2677
                  %v2679 = vld [vmem:[%s2601 + $0x130] sm:$0xff]
                  %2680 = vst [vmem:[%s2602 + $0x130] sm:$0xff] %v2679
                  %v2681 = vld [vmem:[%s2601 + $0x138] sm:$0xff]
                  %2682 = vst [vmem:[%s2602 + $0x138] sm:$0xff] %v2681
                  %v2683 = vld [vmem:[%s2601 + $0x140] sm:$0xff]
                  %2684 = vst [vmem:[%s2602 + $0x140] sm:$0xff] %v2683
                  %v2685 = vld [vmem:[%s2601 + $0x148] sm:$0xff]
                  %2686 = vst [vmem:[%s2602 + $0x148] sm:$0xff] %v2685
                  %v2687 = vld [vmem:[%s2601 + $0x150] sm:$0xff]
                  %2688 = vst [vmem:[%s2602 + $0x150] sm:$0xff] %v2687
                  %v2689 = vld [vmem:[%s2601 + $0x158] sm:$0xff]
                  %2690 = vst [vmem:[%s2602 + $0x158] sm:$0xff] %v2689
                  %v2691 = vld [vmem:[%s2601 + $0x160] sm:$0xff]
                  %2692 = vst [vmem:[%s2602 + $0x160] sm:$0xff] %v2691
                  %v2693 = vld [vmem:[%s2601 + $0x168] sm:$0xff]
                  %2694 = vst [vmem:[%s2602 + $0x168] sm:$0xff] %v2693
                  %v2695 = vld [vmem:[%s2601 + $0x170] sm:$0xff]
                  %2696 = vst [vmem:[%s2602 + $0x170] sm:$0xff] %v2695
                  %v2697 = vld [vmem:[%s2601 + $0x178] sm:$0xff]
                  %2698 = vst [vmem:[%s2602 + $0x178] sm:$0xff] %v2697
                  %v2699 = vld [vmem:[%s2601 + $0x180] sm:$0xff]
                  %2700 = vst [vmem:[%s2602 + $0x180] sm:$0xff] %v2699
                  %v2701 = vld [vmem:[%s2601 + $0x188] sm:$0xff]
                  %2702 = vst [vmem:[%s2602 + $0x188] sm:$0xff] %v2701
                  %v2703 = vld [vmem:[%s2601 + $0x190] sm:$0xff]
                  %2704 = vst [vmem:[%s2602 + $0x190] sm:$0xff] %v2703
                  %v2705 = vld [vmem:[%s2601 + $0x198] sm:$0xff]
                  %2706 = vst [vmem:[%s2602 + $0x198] sm:$0xff] %v2705
                  %v2707 = vld [vmem:[%s2601 + $0x1a0] sm:$0xff]
                  %2708 = vst [vmem:[%s2602 + $0x1a0] sm:$0xff] %v2707
                  %v2709 = vld [vmem:[%s2601 + $0x1a8] sm:$0xff]
                  %2710 = vst [vmem:[%s2602 + $0x1a8] sm:$0xff] %v2709
                  %v2711 = vld [vmem:[%s2601 + $0x1b0] sm:$0xff]
                  %2712 = vst [vmem:[%s2602 + $0x1b0] sm:$0xff] %v2711
                  %v2713 = vld [vmem:[%s2601 + $0x1b8] sm:$0xff]
                  %2714 = vst [vmem:[%s2602 + $0x1b8] sm:$0xff] %v2713
                  %v2715 = vld [vmem:[%s2601 + $0x1c0] sm:$0xff]
                  %2716 = vst [vmem:[%s2602 + $0x1c0] sm:$0xff] %v2715
                  %v2717 = vld [vmem:[%s2601 + $0x1c8] sm:$0xff]
                  %2718 = vst [vmem:[%s2602 + $0x1c8] sm:$0xff] %v2717
                  %v2719 = vld [vmem:[%s2601 + $0x1d0] sm:$0xff]
                  %2720 = vst [vmem:[%s2602 + $0x1d0] sm:$0xff] %v2719
                  %v2721 = vld [vmem:[%s2601 + $0x1d8] sm:$0xff]
                  %2722 = vst [vmem:[%s2602 + $0x1d8] sm:$0xff] %v2721
                  %v2723 = vld [vmem:[%s2601 + $0x1e0] sm:$0xff]
                  %2724 = vst [vmem:[%s2602 + $0x1e0] sm:$0xff] %v2723
                  %v2725 = vld [vmem:[%s2601 + $0x1e8] sm:$0xff]
                  %2726 = vst [vmem:[%s2602 + $0x1e8] sm:$0xff] %v2725
                  %v2727 = vld [vmem:[%s2601 + $0x1f0] sm:$0xff]
                  %2728 = vst [vmem:[%s2602 + $0x1f0] sm:$0xff] %v2727
                  %v2729 = vld [vmem:[%s2601 + $0x1f8] sm:$0xff]
                  %2730 = vst [vmem:[%s2602 + $0x1f8] sm:$0xff] %v2729
                  %s2731 = sadd.s32 1, %s2600
                  %p2732 = scmp.ge.s32.totalorder %s2731, %s2593
                  %s2733 = scalar_select %p2732, 0, %s2731
                  %s2734 = smul.u32 %s2733, 512
                  %s2735 = smul.u32 %s2733, 512
                  %s2736 = scalar_lea.vmem %s2400, %s2734 [#allocation3]
                  %s2737 = scalar_lea.vmem %s2411, %s2735
                $region71: #{tpu_custom_call.1} parent=65 // loop_footer
                  %s2597 = sadd.s32 %s2595, 1
                $region72: #{tpu_custom_call.1} parent=65 // loop_footer_branch
                  %2594 = sbr.rel target = $region68
                $region73: #{tpu_custom_call.1} parent=65 // loop_exit
                  _
                %s2738 = sshrl.u32 %s2407, 6
                %s2739 = sand.u32 %s2407, 63
                %s2740 = smul.u32 %s2738, 64
                %s2741 = smul.u32 8, %s2740
                %s2742 = scalar_lea.vmem %s2400, %s2741 [#allocation3]
                %s2743 = smul.u32 8, %s2740
                %s2744 = scalar_lea.vmem %s2411, %s2743
                // While loop
                $region74: #{tpu_custom_call.1} parent=65 // loop_pre_header
                  _
                $region75: #{tpu_custom_call.1} parent=65 // loop_header
                  %s2746 = sphi 0, %s2748
                  %p2747 = scmp.ge.s32.totalorder %s2746, %s2739
                  %s2751 = sphi 0, %s2758
                  %s2752 = sphi %s2742, %s2761
                  %s2753 = sphi %s2744, %s2762
                $region76: #{tpu_custom_call.1} parent=65 // loop_header_branch
                  %2750 = sbr.rel (%p2747) target = $region80
                $region77: #{tpu_custom_call.1} parent=65 // loop_body
                  %v2754 = vld [vmem:[%s2752] sm:$0xff]
                  %2755 = vst [vmem:[%s2753] sm:$0xff] %v2754
                  %s2756 = sadd.s32 1, %s2751
                  %p2757 = scmp.ge.s32.totalorder %s2756, %s2739
                  %s2758 = scalar_select %p2757, 0, %s2756
                  %s2759 = smul.u32 %s2758, 8
                  %s2760 = smul.u32 %s2758, 8
                  %s2761 = scalar_lea.vmem %s2742, %s2759 [#allocation3]
                  %s2762 = scalar_lea.vmem %s2744, %s2760
                $region78: #{tpu_custom_call.1} parent=65 // loop_footer
                  %s2748 = sadd.s32 %s2746, 1
                $region79: #{tpu_custom_call.1} parent=65 // loop_footer_branch
                  %2745 = sbr.rel target = $region75
                $region80: #{tpu_custom_call.1} parent=65 // loop_exit
                  _
              $region66: #{tpu_custom_call.1} parent=43 // pred_fallthru
                _
              // Predicated region
              $region81: #{tpu_custom_call.1} parent=43 // pred_check
                _
              $region82: #{tpu_custom_call.1} parent=43 // pred_check_branch
                %2764 = sbr.rel target = $region84
              $region83: #{tpu_custom_call.1} parent=43 // pred_region
                _
              $region84: #{tpu_custom_call.1} parent=43 // pred_fallthru
                _
            $region44: #{tpu_custom_call.1} parent=39 // pred_fallthru
              _
            // Predicated region
            $region45: #{tpu_custom_call.1} parent=39 // pred_check
              _
            $region46: #{tpu_custom_call.1} parent=39 // pred_check_branch
              %2418 = sbr.rel target = $region48
            $region47: #{tpu_custom_call.1} parent=39 // pred_region
              %s2420 = ssub.s32 256, 1
              %s2421 = sshrl.u32 %s2407, 6
              // While loop
              $region49: #{tpu_custom_call.1} parent=47 // loop_pre_header
                _
              $region50: #{tpu_custom_call.1} parent=47 // loop_header
                %s2423 = sphi 0, %s2425
                %p2424 = scmp.ge.s32.totalorder %s2423, %s2421
                %s2428 = sphi 0, %s2561
                %s2429 = sphi %s2400, %s2564
                %s2430 = sphi %s2411, %s2565
              $region51: #{tpu_custom_call.1} parent=47 // loop_header_branch
                %2427 = sbr.rel (%p2424) target = $region55
              $region52: #{tpu_custom_call.1} parent=47 // loop_body
                %v2431 = vld [vmem:[%s2429] sm:%s2420]
                %2432 = vst [vmem:[%s2430] sm:%s2420] %v2431
                %v2433 = vld [vmem:[%s2429 + $0x8] sm:%s2420]
                %2434 = vst [vmem:[%s2430 + $0x8] sm:%s2420] %v2433
                %v2435 = vld [vmem:[%s2429 + $0x10] sm:%s2420]
                %2436 = vst [vmem:[%s2430 + $0x10] sm:%s2420] %v2435
                %v2437 = vld [vmem:[%s2429 + $0x18] sm:%s2420]
                %2438 = vst [vmem:[%s2430 + $0x18] sm:%s2420] %v2437
                %v2439 = vld [vmem:[%s2429 + $0x20] sm:%s2420]
                %2440 = vst [vmem:[%s2430 + $0x20] sm:%s2420] %v2439
                %v2441 = vld [vmem:[%s2429 + $0x28] sm:%s2420]
                %2442 = vst [vmem:[%s2430 + $0x28] sm:%s2420] %v2441
                %v2443 = vld [vmem:[%s2429 + $0x30] sm:%s2420]
                %2444 = vst [vmem:[%s2430 + $0x30] sm:%s2420] %v2443
                %v2445 = vld [vmem:[%s2429 + $0x38] sm:%s2420]
                %2446 = vst [vmem:[%s2430 + $0x38] sm:%s2420] %v2445
                %v2447 = vld [vmem:[%s2429 + $0x40] sm:%s2420]
                %2448 = vst [vmem:[%s2430 + $0x40] sm:%s2420] %v2447
                %v2449 = vld [vmem:[%s2429 + $0x48] sm:%s2420]
                %2450 = vst [vmem:[%s2430 + $0x48] sm:%s2420] %v2449
                %v2451 = vld [vmem:[%s2429 + $0x50] sm:%s2420]
                %2452 = vst [vmem:[%s2430 + $0x50] sm:%s2420] %v2451
                %v2453 = vld [vmem:[%s2429 + $0x58] sm:%s2420]
                %2454 = vst [vmem:[%s2430 + $0x58] sm:%s2420] %v2453
                %v2455 = vld [vmem:[%s2429 + $0x60] sm:%s2420]
                %2456 = vst [vmem:[%s2430 + $0x60] sm:%s2420] %v2455
                %v2457 = vld [vmem:[%s2429 + $0x68] sm:%s2420]
                %2458 = vst [vmem:[%s2430 + $0x68] sm:%s2420] %v2457
                %v2459 = vld [vmem:[%s2429 + $0x70] sm:%s2420]
                %2460 = vst [vmem:[%s2430 + $0x70] sm:%s2420] %v2459
                %v2461 = vld [vmem:[%s2429 + $0x78] sm:%s2420]
                %2462 = vst [vmem:[%s2430 + $0x78] sm:%s2420] %v2461
                %v2463 = vld [vmem:[%s2429 + $0x80] sm:%s2420]
                %2464 = vst [vmem:[%s2430 + $0x80] sm:%s2420] %v2463
                %v2465 = vld [vmem:[%s2429 + $0x88] sm:%s2420]
                %2466 = vst [vmem:[%s2430 + $0x88] sm:%s2420] %v2465
                %v2467 = vld [vmem:[%s2429 + $0x90] sm:%s2420]
                %2468 = vst [vmem:[%s2430 + $0x90] sm:%s2420] %v2467
                %v2469 = vld [vmem:[%s2429 + $0x98] sm:%s2420]
                %2470 = vst [vmem:[%s2430 + $0x98] sm:%s2420] %v2469
                %v2471 = vld [vmem:[%s2429 + $0xa0] sm:%s2420]
                %2472 = vst [vmem:[%s2430 + $0xa0] sm:%s2420] %v2471
                %v2473 = vld [vmem:[%s2429 + $0xa8] sm:%s2420]
                %2474 = vst [vmem:[%s2430 + $0xa8] sm:%s2420] %v2473
                %v2475 = vld [vmem:[%s2429 + $0xb0] sm:%s2420]
                %2476 = vst [vmem:[%s2430 + $0xb0] sm:%s2420] %v2475
                %v2477 = vld [vmem:[%s2429 + $0xb8] sm:%s2420]
                %2478 = vst [vmem:[%s2430 + $0xb8] sm:%s2420] %v2477
                %v2479 = vld [vmem:[%s2429 + $0xc0] sm:%s2420]
                %2480 = vst [vmem:[%s2430 + $0xc0] sm:%s2420] %v2479
                %v2481 = vld [vmem:[%s2429 + $0xc8] sm:%s2420]
                %2482 = vst [vmem:[%s2430 + $0xc8] sm:%s2420] %v2481
                %v2483 = vld [vmem:[%s2429 + $0xd0] sm:%s2420]
                %2484 = vst [vmem:[%s2430 + $0xd0] sm:%s2420] %v2483
                %v2485 = vld [vmem:[%s2429 + $0xd8] sm:%s2420]
                %2486 = vst [vmem:[%s2430 + $0xd8] sm:%s2420] %v2485
                %v2487 = vld [vmem:[%s2429 + $0xe0] sm:%s2420]
                %2488 = vst [vmem:[%s2430 + $0xe0] sm:%s2420] %v2487
                %v2489 = vld [vmem:[%s2429 + $0xe8] sm:%s2420]
                %2490 = vst [vmem:[%s2430 + $0xe8] sm:%s2420] %v2489
                %v2491 = vld [vmem:[%s2429 + $0xf0] sm:%s2420]
                %2492 = vst [vmem:[%s2430 + $0xf0] sm:%s2420] %v2491
                %v2493 = vld [vmem:[%s2429 + $0xf8] sm:%s2420]
                %2494 = vst [vmem:[%s2430 + $0xf8] sm:%s2420] %v2493
                %v2495 = vld [vmem:[%s2429 + $0x100] sm:%s2420]
                %2496 = vst [vmem:[%s2430 + $0x100] sm:%s2420] %v2495
                %v2497 = vld [vmem:[%s2429 + $0x108] sm:%s2420]
                %2498 = vst [vmem:[%s2430 + $0x108] sm:%s2420] %v2497
                %v2499 = vld [vmem:[%s2429 + $0x110] sm:%s2420]
                %2500 = vst [vmem:[%s2430 + $0x110] sm:%s2420] %v2499
                %v2501 = vld [vmem:[%s2429 + $0x118] sm:%s2420]
                %2502 = vst [vmem:[%s2430 + $0x118] sm:%s2420] %v2501
                %v2503 = vld [vmem:[%s2429 + $0x120] sm:%s2420]
                %2504 = vst [vmem:[%s2430 + $0x120] sm:%s2420] %v2503
                %v2505 = vld [vmem:[%s2429 + $0x128] sm:%s2420]
                %2506 = vst [vmem:[%s2430 + $0x128] sm:%s2420] %v2505
                %v2507 = vld [vmem:[%s2429 + $0x130] sm:%s2420]
                %2508 = vst [vmem:[%s2430 + $0x130] sm:%s2420] %v2507
                %v2509 = vld [vmem:[%s2429 + $0x138] sm:%s2420]
                %2510 = vst [vmem:[%s2430 + $0x138] sm:%s2420] %v2509
                %v2511 = vld [vmem:[%s2429 + $0x140] sm:%s2420]
                %2512 = vst [vmem:[%s2430 + $0x140] sm:%s2420] %v2511
                %v2513 = vld [vmem:[%s2429 + $0x148] sm:%s2420]
                %2514 = vst [vmem:[%s2430 + $0x148] sm:%s2420] %v2513
                %v2515 = vld [vmem:[%s2429 + $0x150] sm:%s2420]
                %2516 = vst [vmem:[%s2430 + $0x150] sm:%s2420] %v2515
                %v2517 = vld [vmem:[%s2429 + $0x158] sm:%s2420]
                %2518 = vst [vmem:[%s2430 + $0x158] sm:%s2420] %v2517
                %v2519 = vld [vmem:[%s2429 + $0x160] sm:%s2420]
                %2520 = vst [vmem:[%s2430 + $0x160] sm:%s2420] %v2519
                %v2521 = vld [vmem:[%s2429 + $0x168] sm:%s2420]
                %2522 = vst [vmem:[%s2430 + $0x168] sm:%s2420] %v2521
                %v2523 = vld [vmem:[%s2429 + $0x170] sm:%s2420]
                %2524 = vst [vmem:[%s2430 + $0x170] sm:%s2420] %v2523
                %v2525 = vld [vmem:[%s2429 + $0x178] sm:%s2420]
                %2526 = vst [vmem:[%s2430 + $0x178] sm:%s2420] %v2525
                %v2527 = vld [vmem:[%s2429 + $0x180] sm:%s2420]
                %2528 = vst [vmem:[%s2430 + $0x180] sm:%s2420] %v2527
                %v2529 = vld [vmem:[%s2429 + $0x188] sm:%s2420]
                %2530 = vst [vmem:[%s2430 + $0x188] sm:%s2420] %v2529
                %v2531 = vld [vmem:[%s2429 + $0x190] sm:%s2420]
                %2532 = vst [vmem:[%s2430 + $0x190] sm:%s2420] %v2531
                %v2533 = vld [vmem:[%s2429 + $0x198] sm:%s2420]
                %2534 = vst [vmem:[%s2430 + $0x198] sm:%s2420] %v2533
                %v2535 = vld [vmem:[%s2429 + $0x1a0] sm:%s2420]
                %2536 = vst [vmem:[%s2430 + $0x1a0] sm:%s2420] %v2535
                %v2537 = vld [vmem:[%s2429 + $0x1a8] sm:%s2420]
                %2538 = vst [vmem:[%s2430 + $0x1a8] sm:%s2420] %v2537
                %v2539 = vld [vmem:[%s2429 + $0x1b0] sm:%s2420]
                %2540 = vst [vmem:[%s2430 + $0x1b0] sm:%s2420] %v2539
                %v2541 = vld [vmem:[%s2429 + $0x1b8] sm:%s2420]
                %2542 = vst [vmem:[%s2430 + $0x1b8] sm:%s2420] %v2541
                %v2543 = vld [vmem:[%s2429 + $0x1c0] sm:%s2420]
                %2544 = vst [vmem:[%s2430 + $0x1c0] sm:%s2420] %v2543
                %v2545 = vld [vmem:[%s2429 + $0x1c8] sm:%s2420]
                %2546 = vst [vmem:[%s2430 + $0x1c8] sm:%s2420] %v2545
                %v2547 = vld [vmem:[%s2429 + $0x1d0] sm:%s2420]
                %2548 = vst [vmem:[%s2430 + $0x1d0] sm:%s2420] %v2547
                %v2549 = vld [vmem:[%s2429 + $0x1d8] sm:%s2420]
                %2550 = vst [vmem:[%s2430 + $0x1d8] sm:%s2420] %v2549
                %v2551 = vld [vmem:[%s2429 + $0x1e0] sm:%s2420]
                %2552 = vst [vmem:[%s2430 + $0x1e0] sm:%s2420] %v2551
                %v2553 = vld [vmem:[%s2429 + $0x1e8] sm:%s2420]
                %2554 = vst [vmem:[%s2430 + $0x1e8] sm:%s2420] %v2553
                %v2555 = vld [vmem:[%s2429 + $0x1f0] sm:%s2420]
                %2556 = vst [vmem:[%s2430 + $0x1f0] sm:%s2420] %v2555
                %v2557 = vld [vmem:[%s2429 + $0x1f8] sm:%s2420]
                %2558 = vst [vmem:[%s2430 + $0x1f8] sm:%s2420] %v2557
                %s2559 = sadd.s32 1, %s2428
                %p2560 = scmp.ge.s32.totalorder %s2559, %s2421
                %s2561 = scalar_select %p2560, 0, %s2559
                %s2562 = smul.u32 %s2561, 512
                %s2563 = smul.u32 %s2561, 512
                %s2564 = scalar_lea.vmem %s2400, %s2562 [#allocation3]
                %s2565 = scalar_lea.vmem %s2411, %s2563
              $region53: #{tpu_custom_call.1} parent=47 // loop_footer
                %s2425 = sadd.s32 %s2423, 1
              $region54: #{tpu_custom_call.1} parent=47 // loop_footer_branch
                %2422 = sbr.rel target = $region50
              $region55: #{tpu_custom_call.1} parent=47 // loop_exit
                _
              %s2566 = sshrl.u32 %s2407, 6
              %s2567 = sand.u32 %s2407, 63
              %s2568 = smul.u32 %s2566, 64
              %s2569 = smul.u32 8, %s2568
              %s2570 = scalar_lea.vmem %s2400, %s2569 [#allocation3]
              %s2571 = smul.u32 8, %s2568
              %s2572 = scalar_lea.vmem %s2411, %s2571
              // While loop
              $region56: #{tpu_custom_call.1} parent=47 // loop_pre_header
                _
              $region57: #{tpu_custom_call.1} parent=47 // loop_header
                %s2574 = sphi 0, %s2576
                %p2575 = scmp.ge.s32.totalorder %s2574, %s2567
                %s2579 = sphi 0, %s2586
                %s2580 = sphi %s2570, %s2589
                %s2581 = sphi %s2572, %s2590
              $region58: #{tpu_custom_call.1} parent=47 // loop_header_branch
                %2578 = sbr.rel (%p2575) target = $region62
              $region59: #{tpu_custom_call.1} parent=47 // loop_body
                %v2582 = vld [vmem:[%s2580] sm:%s2420]
                %2583 = vst [vmem:[%s2581] sm:%s2420] %v2582
                %s2584 = sadd.s32 1, %s2579
                %p2585 = scmp.ge.s32.totalorder %s2584, %s2567
                %s2586 = scalar_select %p2585, 0, %s2584
                %s2587 = smul.u32 %s2586, 8
                %s2588 = smul.u32 %s2586, 8
                %s2589 = scalar_lea.vmem %s2570, %s2587 [#allocation3]
                %s2590 = scalar_lea.vmem %s2572, %s2588
              $region60: #{tpu_custom_call.1} parent=47 // loop_footer
                %s2576 = sadd.s32 %s2574, 1
              $region61: #{tpu_custom_call.1} parent=47 // loop_footer_branch
                %2573 = sbr.rel target = $region57
              $region62: #{tpu_custom_call.1} parent=47 // loop_exit
                _
            $region48: #{tpu_custom_call.1} parent=39 // pred_fallthru
              _
          $region40: #{tpu_custom_call.1} parent=35 // pred_fallthru
            _
          %2765 = vnop
        $region36: #{tpu_custom_call.1} parent=31 // pred_fallthru
          _
      $region32: #{tpu_custom_call.1} parent=5 // pred_fallthru
        _
      %p2766 = scmp.le.s32.totalorder 2, %s10
      // Predicated region
      $region85: #{tpu_custom_call.1} parent=5 // pred_check
        %p2767 = pneg %p2766
      $region86: #{tpu_custom_call.1} parent=5 // pred_check_branch
        %2769 = sbr.rel (%p2767) target = $region88
      $region87: #{tpu_custom_call.1} parent=5 // pred_region
        %s2770 = ssub.s32 %s10, 2
        // Predicated region
        $region89: #{tpu_custom_call.1} parent=87 // pred_check
          %p2771 = pneg %p107
        $region90: #{tpu_custom_call.1} parent=87 // pred_check_branch
          %2773 = sbr.rel (%p2771) target = $region92
        $region91: #{tpu_custom_call.1} parent=87 // pred_region
          %s2774 = sand.u32 %s92, 1
          %s2775 = sand.u32 %s92, 1
          %s2776 = smul.addr %s2775, 1032
          %s2777 = scalar_lea.vmem [#allocation3], %s2776
        $region92: #{tpu_custom_call.1} parent=87 // pred_fallthru
          _
      $region88: #{tpu_custom_call.1} parent=5 // pred_fallthru
        _
    $region6: #{tpu_custom_call.1} parent=1 // loop_footer
      %s14 = sadd.s32 1, %s10
    $region7: #{tpu_custom_call.1} parent=1 // loop_footer_branch
      %9 = sbr.rel target = $region3
    $region8: #{tpu_custom_call.1} parent=1 // loop_exit
      _

</llo_original>
